<compile_context>
chip_gen: v6e
topology: v6e:2x2x1
jax: 0.10.0
libtpu: 0.0.40
codegen_flags: <defaults>
</compile_context>

<pallas_src>
import jax
import jax.numpy as jnp
from jax.experimental import pallas as pl
from jax.experimental.pallas import tpu as pltpu

ACTION_DIM = 2
ENVIRONMENT_DIM = 20
ROBOT_DIM = 4
STATE_DIM = ENVIRONMENT_DIM + ROBOT_DIM  # 24
H1 = 800
H2 = 600

# Lane-aligned padded feature sizes (multiples of 128).
H1_PAD = 896    # 800 -> 896
H2_PAD = 640    # 600 -> 640
OUT_PAD = 128   # 2   -> 128 (lane-dense output slab)


def actor_kernel(s_ref, w1_ref, b1_ref, w2_ref, b2_ref, w3_ref, b3_ref, o_ref):
    f32 = jnp.float32
    bf16 = jnp.bfloat16
    # Layer 1: (Tb, 24)bf16 @ (24, 896)bf16 -> f32 acc; bias + ReLU in f32.
    h1 = jnp.dot(s_ref[...].astype(bf16), w1_ref[...], preferred_element_type=f32)
    h1 = jnp.maximum(h1 + b1_ref[...], 0.0)
    # Layer 2: (Tb, 896) @ (896, 640).  Padded rows/cols of w2 are 0.
    h2 = jnp.dot(h1.astype(bf16), w2_ref[...], preferred_element_type=f32)
    h2 = jnp.maximum(h2 + b2_ref[...], 0.0)
    # Layer 3: (Tb, 640) @ (640, 128) + tanh.  Real actions live in [:, :2].
    a = jnp.dot(h2.astype(bf16), w3_ref[...], preferred_element_type=f32)
    o_ref[...] = jnp.tanh(a + b3_ref[...]).astype(o_ref.dtype)


def pack_params(params):
    """One-time host-side pack: pad feature dims to lane multiples.

    Weights -> bf16 (halves the dominant HBM traffic), biases -> f32 (tiny,
    avoids per-call casts in the kernel)."""
    w1, b1, w2, b2, w3, b3 = params

    def pad_w(x, rows, cols):
        out = jnp.zeros((rows, cols), jnp.bfloat16)
        return out.at[: x.shape[0], : x.shape[1]].set(x.astype(jnp.bfloat16))

    def pad_b(x, cols):
        out = jnp.zeros((1, cols), jnp.float32)
        return out.at[:, : x.shape[1]].set(x.astype(jnp.float32))

    return (
        pad_w(w1, STATE_DIM, H1_PAD), pad_b(b1, H1_PAD),
        pad_w(w2, H1_PAD, H2_PAD),    pad_b(b2, H2_PAD),
        pad_w(w3, H2_PAD, OUT_PAD),   pad_b(b3, OUT_PAD),
    )


def actor_forward(s, packed_params):
    """s: [B, STATE_DIM] float32. Returns [B, ACTION_DIM] float32."""
    w1, b1, w2, b2, w3, b3 = packed_params
    B = s.shape[0]
    # Small batches: one grid point.  Larger batches: tile the batch axis and
    # keep the weights VMEM-resident across tiles (constant index_map).
    tile_b = 8 if B <= 8 else 128
    b_pad = pl.cdiv(B, tile_b) * tile_b
    s_pad = jnp.zeros((b_pad, STATE_DIM), jnp.float32).at[:B].set(
        s.astype(jnp.float32)
    )

    const = lambda i: (0, 0)          # weights: same block every iteration
    batch = lambda i: (i, 0)          # activations: walk the batch axis

    out = pl.pallas_call(
        actor_kernel,
        out_shape=jax.ShapeDtypeStruct((b_pad, OUT_PAD), jnp.float32),
        grid=(b_pad // tile_b,),
        in_specs=[
            pl.BlockSpec((tile_b, STATE_DIM), batch),
            pl.BlockSpec((STATE_DIM, H1_PAD), const),
            pl.BlockSpec((1, H1_PAD), const),
            pl.BlockSpec((H1_PAD, H2_PAD), const),
            pl.BlockSpec((1, H2_PAD), const),
            pl.BlockSpec((H2_PAD, OUT_PAD), const),
            pl.BlockSpec((1, OUT_PAD), const),
        ],
        out_specs=pl.BlockSpec((tile_b, OUT_PAD), batch),
        compiler_params=pltpu.CompilerParams(
            dimension_semantics=("parallel",),   # megacore-shardable on v7x
            vmem_limit_bytes=32 << 20,
        ),
    )(s_pad, w1, b1, w2, b2, w3, b3)
    # Padded rows hold tanh(b3) (non-zero) — sliced away here, never relied on.
    return out[:B, :ACTION_DIM]


def init_params(key):
    """Deterministic synthetic params, PyTorch-Linear-style uniform fan-in init."""
    keys = jax.random.split(key, 6)

    def uniform(k, shape, fan_in):
        bound = 1.0 / jnp.sqrt(jnp.float32(fan_in))
        return jax.random.uniform(k, shape, jnp.float32, -bound, bound)

    w1 = uniform(keys[0], (STATE_DIM, H1), STATE_DIM)   # [in, out]
    b1 = uniform(keys[1], (1, H1), STATE_DIM)
    w2 = uniform(keys[2], (H1, H2), H1)
    b2 = uniform(keys[3], (1, H2), H1)
    w3 = uniform(keys[4], (H2, ACTION_DIM), H2)
    b3 = uniform(keys[5], (1, ACTION_DIM), H2)
    return (w1, b1, w2, b2, w3, b3)


def actor_forward_ref(s, packed_params):
    """Pure-JAX reference using the same bf16-rounded weights, f32 math."""
    w1, b1, w2, b2, w3, b3 = packed_params
    f32 = jnp.float32
    h1 = jnp.maximum(s @ w1[:STATE_DIM, :H1].astype(f32) + b1[:, :H1], 0.0)
    h2 = jnp.maximum(h1 @ w2[:H1, :H2].astype(f32) + b2[:, :H2], 0.0)
    return jnp.tanh(h2 @ w3[:H2, :ACTION_DIM].astype(f32) + b3[:, :ACTION_DIM])


if __name__ == "__main__":
    key = jax.random.PRNGKey(0)
    k_param, k_state = jax.random.split(key)
    params = init_params(k_param)
    packed = pack_params(params)  # one-time: pad + cast

    # Small batch (single grid point) and a larger batch (exercises the
    # batch grid with VMEM-resident weights).
    for batch in (2, 130):
        s = jax.random.normal(
            jax.random.fold_in(k_state, batch), (batch, STATE_DIM), jnp.float32
        )
        a = jax.block_until_ready(actor_forward(s, packed))
        a_ref = actor_forward_ref(s, packed)
        assert a.shape == (batch, ACTION_DIM), a.shape
        # bf16 MXU operands on both paths; tolerance reflects bf16 rounding.
        assert jnp.allclose(a, a_ref, atol=2e-2, rtol=2e-2), (a, a_ref)

    print("KERNEL_OK")
</pallas_src>

<mosaic_0001>
module attributes {stable_mosaic.version = 11 : i64} {
  func.func @actor_kernel(%arg0: i32, %arg1: memref<8x24xf32, #tpu.memory_space<vmem>>, %arg2: memref<24x896xbf16, #tpu.memory_space<vmem>>, %arg3: memref<1x896xf32, #tpu.memory_space<vmem>>, %arg4: memref<896x640xbf16, #tpu.memory_space<vmem>>, %arg5: memref<1x640xf32, #tpu.memory_space<vmem>>, %arg6: memref<640x128xbf16, #tpu.memory_space<vmem>>, %arg7: memref<1x128xf32, #tpu.memory_space<vmem>>, %arg8: memref<8x128xf32, #tpu.memory_space<vmem>>) attributes {dimension_semantics = [#tpu.dimension_semantics<parallel>], iteration_bounds = array<i64: 1>, scalar_prefetch = 0 : i64, scratch_operands = 0 : i64, tpu.core_type = #tpu.core_type<tc>, window_params = [{transform_indices = @transform_0, window_bounds = array<i64: 8, 24>}, {pipeline_mode = #tpu.pipeline_mode<synchronous>, transform_indices = @transform_1, window_bounds = array<i64: 24, 896>}, {pipeline_mode = #tpu.pipeline_mode<synchronous>, transform_indices = @transform_2, window_bounds = array<i64: 1, 896>}, {pipeline_mode = #tpu.pipeline_mode<synchronous>, transform_indices = @transform_3, window_bounds = array<i64: 896, 640>}, {pipeline_mode = #tpu.pipeline_mode<synchronous>, transform_indices = @transform_4, window_bounds = array<i64: 1, 640>}, {pipeline_mode = #tpu.pipeline_mode<synchronous>, transform_indices = @transform_5, window_bounds = array<i64: 640, 128>}, {pipeline_mode = #tpu.pipeline_mode<synchronous>, transform_indices = @transform_6, window_bounds = array<i64: 1, 128>}, {transform_indices = @transform_7, window_bounds = array<i64: 8, 128>}]} {
    %c0 = arith.constant 0 : index
    %c0_0 = arith.constant 0 : index
    %0 = vector.load %arg1[%c0, %c0_0] : memref<8x24xf32, #tpu.memory_space<vmem>>, vector<8x24xf32>
    %1 = arith.truncf %0 : vector<8x24xf32> to vector<8x24xbf16>
    %c0_1 = arith.constant 0 : index
    %c0_2 = arith.constant 0 : index
    %2 = vector.load %arg2[%c0_1, %c0_2] : memref<24x896xbf16, #tpu.memory_space<vmem>>, vector<24x896xbf16>
    %cst = arith.constant dense<0.000000e+00> : vector<8x896xf32>
    %3 = tpu.matmul %1, %2, %cst {dimension_numbers = #tpu.dot_dimension_numbers<[1], [0], [0], [1], [0, 0, 1, 1], [], []>} : vector<8x24xbf16>, vector<24x896xbf16>, vector<8x896xf32> -> vector<8x896xf32>
    %c0_3 = arith.constant 0 : index
    %c0_4 = arith.constant 0 : index
    %4 = vector.load %arg3[%c0_3, %c0_4] : memref<1x896xf32, #tpu.memory_space<vmem>>, vector<1x896xf32>
    %5 = vector.broadcast %4 : vector<1x896xf32> to vector<8x896xf32>
    %6 = arith.addf %3, %5 : vector<8x896xf32>
    %cst_5 = arith.constant 0.000000e+00 : f32
    %7 = vector.broadcast %cst_5 : f32 to vector<8x896xf32>
    %8 = arith.maximumf %6, %7 : vector<8x896xf32>
    %9 = arith.truncf %8 : vector<8x896xf32> to vector<8x896xbf16>
    %c0_6 = arith.constant 0 : index
    %c0_7 = arith.constant 0 : index
    %10 = vector.load %arg4[%c0_6, %c0_7] : memref<896x640xbf16, #tpu.memory_space<vmem>>, vector<896x640xbf16>
    %cst_8 = arith.constant dense<0.000000e+00> : vector<8x640xf32>
    %11 = tpu.matmul %9, %10, %cst_8 {dimension_numbers = #tpu.dot_dimension_numbers<[1], [0], [0], [1], [0, 0, 1, 1], [], []>} : vector<8x896xbf16>, vector<896x640xbf16>, vector<8x640xf32> -> vector<8x640xf32>
    %c0_9 = arith.constant 0 : index
    %c0_10 = arith.constant 0 : index
    %12 = vector.load %arg5[%c0_9, %c0_10] : memref<1x640xf32, #tpu.memory_space<vmem>>, vector<1x640xf32>
    %13 = vector.broadcast %12 : vector<1x640xf32> to vector<8x640xf32>
    %14 = arith.addf %11, %13 : vector<8x640xf32>
    %cst_11 = arith.constant 0.000000e+00 : f32
    %15 = vector.broadcast %cst_11 : f32 to vector<8x640xf32>
    %16 = arith.maximumf %14, %15 : vector<8x640xf32>
    %17 = arith.truncf %16 : vector<8x640xf32> to vector<8x640xbf16>
    %c0_12 = arith.constant 0 : index
    %c0_13 = arith.constant 0 : index
    %18 = vector.load %arg6[%c0_12, %c0_13] : memref<640x128xbf16, #tpu.memory_space<vmem>>, vector<640x128xbf16>
    %cst_14 = arith.constant dense<0.000000e+00> : vector<8x128xf32>
    %19 = tpu.matmul %17, %18, %cst_14 {dimension_numbers = #tpu.dot_dimension_numbers<[1], [0], [0], [1], [0, 0, 1, 1], [], []>} : vector<8x640xbf16>, vector<640x128xbf16>, vector<8x128xf32> -> vector<8x128xf32>
    %c0_15 = arith.constant 0 : index
    %c0_16 = arith.constant 0 : index
    %20 = vector.load %arg7[%c0_15, %c0_16] : memref<1x128xf32, #tpu.memory_space<vmem>>, vector<1x128xf32>
    %21 = vector.broadcast %20 : vector<1x128xf32> to vector<8x128xf32>
    %22 = arith.addf %19, %21 : vector<8x128xf32>
    %23 = math.tanh %22 : vector<8x128xf32>
    %c0_17 = arith.constant 0 : index
    %c0_18 = arith.constant 0 : index
    %24 = vector.load %arg8[%c0_17, %c0_18] : memref<8x128xf32, #tpu.memory_space<vmem>>, vector<8x128xf32>
    tpu.vector_store %arg8[%c0_17, %c0_18], %23 {strides = array<i32>} : memref<8x128xf32, #tpu.memory_space<vmem>>, vector<8x128xf32>,
    return
  }
  func.func @transform_0(%arg0: i32) -> (i32, i32) {
    %c0_i32 = arith.constant 0 : i32
    %c0_i32_0 = arith.constant 0 : i32
    return %arg0, %c0_i32 : i32, i32
  }
  func.func @transform_1(%arg0: i32) -> (i32, i32) {
    %c0_i32 = arith.constant 0 : i32
    %c0_i32_0 = arith.constant 0 : i32
    %c0_i32_1 = arith.constant 0 : i32
    return %c0_i32, %c0_i32_0 : i32, i32
  }
  func.func @transform_2(%arg0: i32) -> (i32, i32) {
    %c0_i32 = arith.constant 0 : i32
    %c0_i32_0 = arith.constant 0 : i32
    %c0_i32_1 = arith.constant 0 : i32
    return %c0_i32, %c0_i32_0 : i32, i32
  }
  func.func @transform_3(%arg0: i32) -> (i32, i32) {
    %c0_i32 = arith.constant 0 : i32
    %c0_i32_0 = arith.constant 0 : i32
    %c0_i32_1 = arith.constant 0 : i32
    return %c0_i32, %c0_i32_0 : i32, i32
  }
  func.func @transform_4(%arg0: i32) -> (i32, i32) {
    %c0_i32 = arith.constant 0 : i32
    %c0_i32_0 = arith.constant 0 : i32
    %c0_i32_1 = arith.constant 0 : i32
    return %c0_i32, %c0_i32_0 : i32, i32
  }
  func.func @transform_5(%arg0: i32) -> (i32, i32) {
    %c0_i32 = arith.constant 0 : i32
    %c0_i32_0 = arith.constant 0 : i32
    %c0_i32_1 = arith.constant 0 : i32
    return %c0_i32, %c0_i32_0 : i32, i32
  }
  func.func @transform_6(%arg0: i32) -> (i32, i32) {
    %c0_i32 = arith.constant 0 : i32
    %c0_i32_0 = arith.constant 0 : i32
    %c0_i32_1 = arith.constant 0 : i32
    return %c0_i32, %c0_i32_0 : i32, i32
  }
  func.func @transform_7(%arg0: i32) -> (i32, i32) {
    %c0_i32 = arith.constant 0 : i32
    %c0_i32_0 = arith.constant 0 : i32
    return %arg0, %c0_i32 : i32, i32
  }
}

</mosaic_0001>

<llo_original>
// kernel: tpu_custom_call.1
$region0: #{tpu_custom_call.1}
  #allocation0 [shape = 'u32[]', space=smem, size = 0x4, offset = 0x4, fixed_abs, tag = 'smem constant byte address 0x4 - core index']
  #allocation1 [shape = 'u32[144,128]{1,0:T(1,128)}', space=vmem, size = 0x12000, scoped, tag = 'internal scratch']
  %s0 = inlined_call_operand.hbm [shape: f32[8,24], index: 0, kind: input, shape index: {}]
  %s1 = inlined_call_operand.hbm [shape: bf16[24,896], index: 1, kind: input, shape index: {}]
  %s2 = inlined_call_operand.hbm [shape: f32[1,896], index: 2, kind: input, shape index: {}]
  %s3 = inlined_call_operand.hbm [shape: bf16[896,640], index: 3, kind: input, shape index: {}]
  %s4 = inlined_call_operand.hbm [shape: f32[1,640], index: 4, kind: input, shape index: {}]
  %s5 = inlined_call_operand.hbm [shape: bf16[640,128], index: 5, kind: input, shape index: {}]
  %s6 = inlined_call_operand.hbm [shape: f32[1,128], index: 6, kind: input, shape index: {}]
  %s7 = inlined_call_operand.hbm [shape: f32[8,128], index: 7, kind: output, shape index: {}]
  %s8 = sld [smem:[#allocation0]]
  $region66: #{tpu_custom_call.1} parent=0
    _
  %s10 = ssub.s32 1, %s8
  %s11 = scalar_select 0, %s10, %s8
  $region1: #{tpu_custom_call.1} parent=0
    #allocation2 [shape = 'u8[4096]{0}', space=vmem, size = 0x1000, scoped, tag = 'input window, operand 0, single buffered']
    #allocation3 [shape = 's32[1]{0}', space=sflag, size = 0x4, scoped, tag = 'scoped memory for tpu_custom_call.1']
    #allocation4 [shape = 's32[1]{0}', space=sflag, size = 0x4, scoped, tag = 'scoped memory for tpu_custom_call.1']
    #allocation5 [shape = 'u8[43008]{0}', space=vmem, size = 0xa800, scoped, tag = 'input window, operand 1, single buffered']
    #allocation6 [shape = 's32[1]{0}', space=sflag, size = 0x4, scoped, tag = 'scoped memory for tpu_custom_call.1']
    #allocation7 [shape = 'u8[3584]{0}', space=vmem, size = 0x1000, scoped, tag = 'input window, operand 2, single buffered']
    #allocation8 [shape = 'u8[1146880]{0}', space=vmem, size = 0x118000, scoped, tag = 'input window, operand 3, single buffered']
    #allocation9 [shape = 's32[1]{0}', space=sflag, size = 0x4, scoped, tag = 'scoped memory for tpu_custom_call.1']
    #allocation10 [shape = 'u8[2560]{0}', space=vmem, size = 0xc00, scoped, tag = 'input window, operand 4, single buffered']
    #allocation11 [shape = 'u8[163840]{0}', space=vmem, size = 0x28000, scoped, tag = 'input window, operand 5, single buffered']
    #allocation12 [shape = 's32[1]{0}', space=sflag, size = 0x4, scoped, tag = 'scoped memory for tpu_custom_call.1']
    #allocation13 [shape = 'u8[512]{0}', space=vmem, size = 0x400, scoped, tag = 'input window, operand 6, single buffered']
    #allocation14 [shape = 'u8[4096]{0}', space=vmem, size = 0x1000, scoped, tag = 'output window, operand 0, single buffered']
    %12 = vsyncpa [#allocation3], 0
    %13 = vsyncpa [#allocation6], 0
    %14 = vsyncpa [#allocation9], 0
    %15 = vsyncpa [#allocation12], 0
    %16 = vsyncpa [#allocation4], 0
    // Predicated region
    $region2: #{tpu_custom_call.1} parent=1 // pred_check
      _
    $region3: #{tpu_custom_call.1} parent=1 // pred_check_branch
      %18 = sbr.rel (0) target = $region5
    $region4: #{tpu_custom_call.1} parent=1 // pred_region
      %s20 = ssub.s32 128, 128
      %21 = vsyncadd [#allocation3], %s20
      %s23 = sshll.u32 [#allocation2], 4
      %s24 = int_to_ptr.vmem [resolvable:$true] %s23
      %26 = dma.hbm_to_vmem [thread:$0]  %s0, 128, %s24, [#allocation3]
    $region5: #{tpu_custom_call.1} parent=1 // pred_fallthru
      _
    // Predicated region
    $region6: #{tpu_custom_call.1} parent=1 // pred_check
      _
    $region7: #{tpu_custom_call.1} parent=1 // pred_check_branch
      %28 = sbr.rel (0) target = $region9
    $region8: #{tpu_custom_call.1} parent=1 // pred_region
      %s30 = ssub.s32 1344, 1344
      %31 = vsyncadd [#allocation6], %s30
      %s32 = sshll.u32 [#allocation5], 4
      %s33 = int_to_ptr.vmem [resolvable:$true] %s32
      %38 = dma.hbm_to_vmem [thread:$0]  %s1, 1344, %s33, [#allocation6], 448, 448, 28
    $region9: #{tpu_custom_call.1} parent=1 // pred_fallthru
      _
    // Predicated region
    $region10: #{tpu_custom_call.1} parent=1 // pred_check
      _
    $region11: #{tpu_custom_call.1} parent=1 // pred_check_branch
      %40 = sbr.rel (0) target = $region13
    $region12: #{tpu_custom_call.1} parent=1 // pred_region
      %s42 = ssub.s32 112, 112
      %43 = vsyncadd [#allocation6], %s42
      %s45 = sshll.u32 [#allocation7], 4
      %s46 = int_to_ptr.vmem [resolvable:$true] %s45
      %48 = dma.hbm_to_vmem [thread:$0]  %s2, 112, %s46, [#allocation6]
    $region13: #{tpu_custom_call.1} parent=1 // pred_fallthru
      _
    // Predicated region
    $region14: #{tpu_custom_call.1} parent=1 // pred_check
      _
    $region15: #{tpu_custom_call.1} parent=1 // pred_check_branch
      %50 = sbr.rel (0) target = $region17
    $region16: #{tpu_custom_call.1} parent=1 // pred_region
      %s52 = ssub.s32 35840, 35840
      %53 = vsyncadd [#allocation9], %s52
      %s54 = sshll.u32 [#allocation8], 4
      %s55 = int_to_ptr.vmem [resolvable:$true] %s54
      %60 = dma.hbm_to_vmem [thread:$0]  %s3, 35840, %s55, [#allocation9], 320, 320, 20
    $region17: #{tpu_custom_call.1} parent=1 // pred_fallthru
      _
    // Predicated region
    $region18: #{tpu_custom_call.1} parent=1 // pred_check
      _
    $region19: #{tpu_custom_call.1} parent=1 // pred_check_branch
      %62 = sbr.rel (0) target = $region21
    $region20: #{tpu_custom_call.1} parent=1 // pred_region
      %s64 = ssub.s32 80, 80
      %65 = vsyncadd [#allocation9], %s64
      %s67 = sshll.u32 [#allocation10], 4
      %s68 = int_to_ptr.vmem [resolvable:$true] %s67
      %70 = dma.hbm_to_vmem [thread:$0]  %s4, 80, %s68, [#allocation9]
    $region21: #{tpu_custom_call.1} parent=1 // pred_fallthru
      _
    // Predicated region
    $region22: #{tpu_custom_call.1} parent=1 // pred_check
      _
    $region23: #{tpu_custom_call.1} parent=1 // pred_check_branch
      %72 = sbr.rel (0) target = $region25
    $region24: #{tpu_custom_call.1} parent=1 // pred_region
      %s74 = ssub.s32 5120, 5120
      %75 = vsyncadd [#allocation12], %s74
      %s76 = sshll.u32 [#allocation11], 4
      %s77 = int_to_ptr.vmem [resolvable:$true] %s76
      %82 = dma.hbm_to_vmem [thread:$0]  %s5, 5120, %s77, [#allocation12], 64, 64, 4
    $region25: #{tpu_custom_call.1} parent=1 // pred_fallthru
      _
    // Predicated region
    $region26: #{tpu_custom_call.1} parent=1 // pred_check
      _
    $region27: #{tpu_custom_call.1} parent=1 // pred_check_branch
      %84 = sbr.rel (0) target = $region29
    $region28: #{tpu_custom_call.1} parent=1 // pred_region
      %s86 = ssub.s32 16, 16
      %87 = vsyncadd [#allocation12], %s86
      %s89 = sshll.u32 [#allocation13], 4
      %s90 = int_to_ptr.vmem [resolvable:$true] %s89
      %92 = dma.hbm_to_vmem [thread:$0]  %s6, 16, %s90, [#allocation12]
    $region29: #{tpu_custom_call.1} parent=1 // pred_fallthru
      _
    // Predicated region
    $region30: #{tpu_custom_call.1} parent=1 // pred_check
      _
    $region31: #{tpu_custom_call.1} parent=1 // pred_check_branch
      %94 = sbr.rel (0) target = $region33
    $region32: #{tpu_custom_call.1} parent=1 // pred_region
      %95 = dma.done [#allocation3], 128
    $region33: #{tpu_custom_call.1} parent=1 // pred_fallthru
      _
    // Predicated region
    $region34: #{tpu_custom_call.1} parent=1 // pred_check
      _
    $region35: #{tpu_custom_call.1} parent=1 // pred_check_branch
      %97 = sbr.rel (0) target = $region37
    $region36: #{tpu_custom_call.1} parent=1 // pred_region
      %98 = dma.done [#allocation6], 1344
    $region37: #{tpu_custom_call.1} parent=1 // pred_fallthru
      _
    // Predicated region
    $region38: #{tpu_custom_call.1} parent=1 // pred_check
      _
    $region39: #{tpu_custom_call.1} parent=1 // pred_check_branch
      %100 = sbr.rel (0) target = $region41
    $region40: #{tpu_custom_call.1} parent=1 // pred_region
      %101 = dma.done [#allocation6], 112
    $region41: #{tpu_custom_call.1} parent=1 // pred_fallthru
      _
    // Predicated region
    $region42: #{tpu_custom_call.1} parent=1 // pred_check
      _
    $region43: #{tpu_custom_call.1} parent=1 // pred_check_branch
      %103 = sbr.rel (0) target = $region45
    $region44: #{tpu_custom_call.1} parent=1 // pred_region
      %104 = dma.done [#allocation9], 35840
    $region45: #{tpu_custom_call.1} parent=1 // pred_fallthru
      _
    // Predicated region
    $region46: #{tpu_custom_call.1} parent=1 // pred_check
      _
    $region47: #{tpu_custom_call.1} parent=1 // pred_check_branch
      %106 = sbr.rel (0) target = $region49
    $region48: #{tpu_custom_call.1} parent=1 // pred_region
      %107 = dma.done [#allocation9], 80
    $region49: #{tpu_custom_call.1} parent=1 // pred_fallthru
      _
    // Predicated region
    $region50: #{tpu_custom_call.1} parent=1 // pred_check
      _
    $region51: #{tpu_custom_call.1} parent=1 // pred_check_branch
      %109 = sbr.rel (0) target = $region53
    $region52: #{tpu_custom_call.1} parent=1 // pred_region
      %110 = dma.done [#allocation12], 5120
    $region53: #{tpu_custom_call.1} parent=1 // pred_fallthru
      _
    // Predicated region
    $region54: #{tpu_custom_call.1} parent=1 // pred_check
      _
    $region55: #{tpu_custom_call.1} parent=1 // pred_check_branch
      %112 = sbr.rel (0) target = $region57
    $region56: #{tpu_custom_call.1} parent=1 // pred_region
      %113 = dma.done [#allocation12], 16
    $region57: #{tpu_custom_call.1} parent=1 // pred_fallthru
      _
    %v115 = vld [vmem:[#allocation2] sm:$0xff]
    %v116 = vpack.c.bf16 %v115, %v115
    %v117 = vld [vmem:[#allocation5] sm:$0xff]
    %v118 = vld [vmem:[#allocation5 + $0x8] sm:$0xff]
    %v119 = vld [vmem:[#allocation5 + $0x10] sm:$0xff]
    %v120 = vld [vmem:[#allocation5 + $0x18] sm:$0xf]
    %v121 = vld [vmem:[#allocation5 + $0x1c] sm:$0xff]
    %v122 = vld [vmem:[#allocation5 + $0x24] sm:$0xff]
    %v123 = vld [vmem:[#allocation5 + $0x2c] sm:$0xff]
    %v124 = vld [vmem:[#allocation5 + $0x34] sm:$0xf]
    %v125 = vld [vmem:[#allocation5 + $0x38] sm:$0xff]
    %v126 = vld [vmem:[#allocation5 + $0x40] sm:$0xff]
    %v127 = vld [vmem:[#allocation5 + $0x48] sm:$0xff]
    %v128 = vld [vmem:[#allocation5 + $0x50] sm:$0xf]
    %v129 = vld [vmem:[#allocation7] sm:$0xff]
    %v131 = vlaneseq
    %v132 = vshrl.u32 %v131, 7
    %v133 = vsub.s32 0, %v132
    %v134 = vrot.slane %v129, %v133
    %v135 = vlaneseq
    %v136 = vshrl.u32 %v135, 7
    %v137 = vsub.s32 1, %v136
    %v138 = vrot.slane %v129, %v137
    %v139 = vlaneseq
    %v140 = vshrl.u32 %v139, 7
    %v141 = vsub.s32 2, %v140
    %v142 = vrot.slane %v129, %v141
    %v143 = vlaneseq
    %v144 = vshrl.u32 %v143, 7
    %v145 = vsub.s32 3, %v144
    %v146 = vrot.slane %v129, %v145
    %v147 = vlaneseq
    %v148 = vshrl.u32 %v147, 7
    %v149 = vsub.s32 4, %v148
    %v150 = vrot.slane %v129, %v149
    %v151 = vlaneseq
    %v152 = vshrl.u32 %v151, 7
    %v153 = vsub.s32 5, %v152
    %v154 = vrot.slane %v129, %v153
    %v155 = vlaneseq
    %v156 = vshrl.u32 %v155, 7
    %v157 = vsub.s32 6, %v156
    %v158 = vrot.slane %v129, %v157
    %v178 = vunpack.c.l.b16 %v117
    %v179 = vunpack.c.h.b16 %v117
    %v180 = vunpack.c.l.b16 %v118
    %v181 = vunpack.c.h.b16 %v118
    %v182 = vunpack.c.l.b16 %v119
    %v183 = vunpack.c.h.b16 %v119
    %v184 = vunpack.c.l.b16 %v120
    %v185 = vunpack.c.l.b16 %v121
    %v186 = vunpack.c.h.b16 %v121
    %v187 = vunpack.c.l.b16 %v122
    %v188 = vunpack.c.h.b16 %v122
    %v189 = vunpack.c.l.b16 %v123
    %v190 = vunpack.c.h.b16 %v123
    %v191 = vunpack.c.l.b16 %v124
    %v192 = vunpack.c.l.b16 %v125
    %v193 = vunpack.c.h.b16 %v125
    %v194 = vunpack.c.l.b16 %v126
    %v195 = vunpack.c.h.b16 %v126
    %v196 = vunpack.c.l.b16 %v127
    %v197 = vunpack.c.h.b16 %v127
    %v198 = vunpack.c.l.b16 %v128
    %v199 = vpack.c.b16 %v185, %v178
    %v200 = vpack.c.b16 %v186, %v179
    %v201 = vpack.c.b16 %v187, %v180
    %v202 = vpack.c.b16 %v188, %v181
    %v203 = vpack.c.b16 %v189, %v182
    %v204 = vpack.c.b16 %v190, %v183
    %v205 = vpack.c.b16 %v191, %v184
    %v206 = vpack.c.b16 %v192, %v192
    %v207 = vpack.c.b16 %v193, %v193
    %v208 = vpack.c.b16 %v194, %v194
    %v209 = vpack.c.b16 %v195, %v195
    %v210 = vpack.c.b16 %v196, %v196
    %v211 = vpack.c.b16 %v197, %v197
    %v212 = vpack.c.b16 %v198, %v198
    %vm220 = vcmask 195584
    %v222 = vsel %vm220, %v116, 0
    %vm224 = vcmask 1043456
    %v226 = vsel %vm224, %v206, 0
    %v229 = vsel %vm224, %v207, 0
    %v232 = vsel %vm224, %v208, 0
    %v235 = vsel %vm224, %v209, 0
    %v238 = vsel %vm224, %v210, 0
    %v241 = vsel %vm224, %v211, 0
    %v244 = vsel %vm224, %v212, 0
    %246 = vmatprep.subr.bf16.mxu0 0
    %247 = vmatpush1.bf16.msra.mxu0 0
    %248 = vmatprep.subr.bf16.mxu0 0
    %249 = vmatpush1.bf16.msra.mxu0 0
    %250 = vmatprep.subr.bf16.mxu0 0
    %251 = vmatpush1.bf16.msra.mxu0 0
    %252 = vmatprep.subr.bf16.mxu0 0
    %253 = vmatpush1.bf16.msra.mxu0 0
    %254 = vmatprep.subr.bf16.mxu0 0
    %255 = vmatpush1.bf16.msra.mxu0 0
    %256 = vmatprep.subr.bf16.mxu0 0
    %257 = vmatpush1.bf16.msra.mxu0 0
    %258 = vmatprep.subr.bf16.mxu0 %v229
    %259 = vmatpush1.bf16.msra.mxu0 %v226
    %260 = vmatprep.subr.bf16.mxu0 %v200
    %261 = vmatpush1.bf16.msra.mxu0 %v199
    %262 = vmatprep.subr.bf16.mxu0 0
    %263 = vmatpush2.bf16.msra.mxu0 0
    %264 = vmatprep.subr.bf16.mxu0 0
    %265 = vmatpush2.bf16.msra.mxu0 0
    %266 = vmatprep.subr.bf16.mxu0 0
    %267 = vmatpush2.bf16.msra.mxu0 0
    %268 = vmatprep.subr.bf16.mxu0 0
    %269 = vmatpush2.bf16.msra.mxu0 0
    %270 = vmatprep.subr.bf16.mxu0 0
    %271 = vmatpush2.bf16.msra.mxu0 0
    %272 = vmatprep.subr.bf16.mxu0 0
    %273 = vmatpush2.bf16.msra.mxu0 0
    %274 = vmatprep.subr.bf16.mxu0 0
    %275 = vmatpush2.bf16.msra.mxu0 0
    %276 = vmatprep.subr.bf16.mxu0 0
    %277 = vmatpush2.bf16.msra.mxu0 0
    %278 = vmatprep.mubr.bf16.mxu0 0
    %279 = vmatmul.mubr.bf16.gmra.mxu0 %v222
    %v280 = vpop.f32.mrf.mxu0
    %v281 = vadd.f32 %v134, %v280
    %v282 = vpop.f32.mrf.mxu0
    %v283 = vadd.f32 %v138, %v282
    %v284 = vpop.f32.mrf.mxu0
    %v285 = vpop.f32.mrf.mxu0
    %286 = vdwg.mxu0
    %287 = vmatprep.subr.bf16.mxu0 0
    %288 = vmatpush1.bf16.msra.mxu0 0
    %289 = vmatprep.subr.bf16.mxu0 0
    %290 = vmatpush1.bf16.msra.mxu0 0
    %291 = vmatprep.subr.bf16.mxu0 0
    %292 = vmatpush1.bf16.msra.mxu0 0
    %293 = vmatprep.subr.bf16.mxu0 0
    %294 = vmatpush1.bf16.msra.mxu0 0
    %295 = vmatprep.subr.bf16.mxu0 0
    %296 = vmatpush1.bf16.msra.mxu0 0
    %297 = vmatprep.subr.bf16.mxu0 0
    %298 = vmatpush1.bf16.msra.mxu0 0
    %299 = vmatprep.subr.bf16.mxu0 %v235
    %300 = vmatpush1.bf16.msra.mxu0 %v232
    %301 = vmatprep.subr.bf16.mxu0 %v202
    %302 = vmatpush1.bf16.msra.mxu0 %v201
    %303 = vmatprep.subr.bf16.mxu0 0
    %304 = vmatpush2.bf16.msra.mxu0 0
    %305 = vmatprep.subr.bf16.mxu0 0
    %306 = vmatpush2.bf16.msra.mxu0 0
    %307 = vmatprep.subr.bf16.mxu0 0
    %308 = vmatpush2.bf16.msra.mxu0 0
    %309 = vmatprep.subr.bf16.mxu0 0
    %310 = vmatpush2.bf16.msra.mxu0 0
    %311 = vmatprep.subr.bf16.mxu0 0
    %312 = vmatpush2.bf16.msra.mxu0 0
    %313 = vmatprep.subr.bf16.mxu0 0
    %314 = vmatpush2.bf16.msra.mxu0 0
    %315 = vmatprep.subr.bf16.mxu0 0
    %316 = vmatpush2.bf16.msra.mxu0 0
    %317 = vmatprep.subr.bf16.mxu0 0
    %318 = vmatpush2.bf16.msra.mxu0 0
    %319 = vmatprep.mubr.bf16.mxu0 0
    %320 = vmatmul.mubr.bf16.gmra.mxu0 %v222
    %v321 = vpop.f32.mrf.mxu0
    %v322 = vadd.f32 %v142, %v321
    %v323 = vpop.f32.mrf.mxu0
    %v324 = vadd.f32 %v146, %v323
    %v325 = vpop.f32.mrf.mxu0
    %v326 = vpop.f32.mrf.mxu0
    %327 = vdwg.mxu0
    %328 = vmatprep.subr.bf16.mxu0 0
    %329 = vmatpush1.bf16.msra.mxu0 0
    %330 = vmatprep.subr.bf16.mxu0 0
    %331 = vmatpush1.bf16.msra.mxu0 0
    %332 = vmatprep.subr.bf16.mxu0 0
    %333 = vmatpush1.bf16.msra.mxu0 0
    %334 = vmatprep.subr.bf16.mxu0 0
    %335 = vmatpush1.bf16.msra.mxu0 0
    %336 = vmatprep.subr.bf16.mxu0 0
    %337 = vmatpush1.bf16.msra.mxu0 0
    %338 = vmatprep.subr.bf16.mxu0 0
    %339 = vmatpush1.bf16.msra.mxu0 0
    %340 = vmatprep.subr.bf16.mxu0 %v241
    %341 = vmatpush1.bf16.msra.mxu0 %v238
    %342 = vmatprep.subr.bf16.mxu0 %v204
    %343 = vmatpush1.bf16.msra.mxu0 %v203
    %344 = vmatprep.subr.bf16.mxu0 0
    %345 = vmatpush2.bf16.msra.mxu0 0
    %346 = vmatprep.subr.bf16.mxu0 0
    %347 = vmatpush2.bf16.msra.mxu0 0
    %348 = vmatprep.subr.bf16.mxu0 0
    %349 = vmatpush2.bf16.msra.mxu0 0
    %350 = vmatprep.subr.bf16.mxu0 0
    %351 = vmatpush2.bf16.msra.mxu0 0
    %352 = vmatprep.subr.bf16.mxu0 0
    %353 = vmatpush2.bf16.msra.mxu0 0
    %354 = vmatprep.subr.bf16.mxu0 0
    %355 = vmatpush2.bf16.msra.mxu0 0
    %356 = vmatprep.subr.bf16.mxu0 0
    %357 = vmatpush2.bf16.msra.mxu0 0
    %358 = vmatprep.subr.bf16.mxu0 0
    %359 = vmatpush2.bf16.msra.mxu0 0
    %360 = vmatprep.mubr.bf16.mxu0 0
    %361 = vmatmul.mubr.bf16.gmra.mxu0 %v222
    %v362 = vpop.f32.mrf.mxu0
    %v363 = vadd.f32 %v150, %v362
    %v364 = vpop.f32.mrf.mxu0
    %v365 = vadd.f32 %v154, %v364
    %v366 = vpop.f32.mrf.mxu0
    %v367 = vpop.f32.mrf.mxu0
    %368 = vdwg.mxu0
    %369 = vmatprep.subr.bf16.mxu0 0
    %370 = vmatpush1.bf16.msra.mxu0 0
    %371 = vmatprep.subr.bf16.mxu0 0
    %372 = vmatpush1.bf16.msra.mxu0 0
    %373 = vmatprep.subr.bf16.mxu0 0
    %374 = vmatpush1.bf16.msra.mxu0 0
    %375 = vmatprep.subr.bf16.mxu0 0
    %376 = vmatpush1.bf16.msra.mxu0 0
    %377 = vmatprep.subr.bf16.mxu0 0
    %378 = vmatpush1.bf16.msra.mxu0 0
    %379 = vmatprep.subr.bf16.mxu0 0
    %380 = vmatpush1.bf16.msra.mxu0 0
    %381 = vmatprep.subr.bf16.mxu0 0
    %382 = vmatpush1.bf16.msra.mxu0 %v244
    %383 = vmatprep.subr.bf16.mxu0 0
    %384 = vmatpush1.bf16.msra.mxu0 %v205
    %385 = vmatprep.subr.bf16.mxu0 0
    %386 = vmatpush2.bf16.msra.mxu0 0
    %387 = vmatprep.subr.bf16.mxu0 0
    %388 = vmatpush2.bf16.msra.mxu0 0
    %389 = vmatprep.subr.bf16.mxu0 0
    %390 = vmatpush2.bf16.msra.mxu0 0
    %391 = vmatprep.subr.bf16.mxu0 0
    %392 = vmatpush2.bf16.msra.mxu0 0
    %393 = vmatprep.subr.bf16.mxu0 0
    %394 = vmatpush2.bf16.msra.mxu0 0
    %395 = vmatprep.subr.bf16.mxu0 0
    %396 = vmatpush2.bf16.msra.mxu0 0
    %397 = vmatprep.subr.bf16.mxu0 0
    %398 = vmatpush2.bf16.msra.mxu0 0
    %399 = vmatprep.subr.bf16.mxu0 0
    %400 = vmatpush2.bf16.msra.mxu0 0
    %401 = vmatprep.mubr.bf16.mxu0 0
    %402 = vmatmul.mubr.bf16.gmra.mxu0 %v222
    %v403 = vpop.f32.mrf.mxu0
    %v404 = vadd.f32 %v158, %v403
    %v405 = vpop.f32.mrf.mxu0
    %v406 = vpop.f32.mrf.mxu0
    %v407 = vpop.f32.mrf.mxu0
    %408 = vdwg.mxu0
    %v409 = vmax.f32 %v281, 0.0
    %v410 = vmax.f32 %v283, 0.0
    %v411 = vmax.f32 %v322, 0.0
    %v412 = vmax.f32 %v324, 0.0
    %v413 = vmax.f32 %v363, 0.0
    %v414 = vmax.f32 %v365, 0.0
    %v415 = vmax.f32 %v404, 0.0
    %v416 = vpack.c.bf16 %v409, %v409
    %v417 = vpack.c.bf16 %v410, %v410
    %v418 = vpack.c.bf16 %v411, %v411
    %v419 = vpack.c.bf16 %v412, %v412
    %v420 = vpack.c.bf16 %v413, %v413
    %v421 = vpack.c.bf16 %v414, %v414
    %v422 = vpack.c.bf16 %v415, %v415
    %v423 = vld [vmem:[#allocation8] sm:$0xff]
    %v424 = vld [vmem:[#allocation8 + $0x8] sm:$0xff]
    %v425 = vld [vmem:[#allocation8 + $0x10] sm:$0xf]
    %v426 = vld [vmem:[#allocation8 + $0x14] sm:$0xff]
    %v427 = vld [vmem:[#allocation8 + $0x1c] sm:$0xff]
    %v428 = vld [vmem:[#allocation8 + $0x24] sm:$0xf]
    %v429 = vld [vmem:[#allocation8 + $0x28] sm:$0xff]
    %v430 = vld [vmem:[#allocation8 + $0x30] sm:$0xff]
    %v431 = vld [vmem:[#allocation8 + $0x38] sm:$0xf]
    %v432 = vld [vmem:[#allocation8 + $0x3c] sm:$0xff]
    %v433 = vld [vmem:[#allocation8 + $0x44] sm:$0xff]
    %v434 = vld [vmem:[#allocation8 + $0x4c] sm:$0xf]
    %v435 = vld [vmem:[#allocation8 + $0x50] sm:$0xff]
    %v436 = vld [vmem:[#allocation8 + $0x58] sm:$0xff]
    %v437 = vld [vmem:[#allocation8 + $0x60] sm:$0xf]
    %v438 = vld [vmem:[#allocation8 + $0x64] sm:$0xff]
    %v439 = vld [vmem:[#allocation8 + $0x6c] sm:$0xff]
    %v440 = vld [vmem:[#allocation8 + $0x74] sm:$0xf]
    %v441 = vld [vmem:[#allocation8 + $0x78] sm:$0xff]
    %v442 = vld [vmem:[#allocation8 + $0x80] sm:$0xff]
    %v443 = vld [vmem:[#allocation8 + $0x88] sm:$0xf]
    %v444 = vld [vmem:[#allocation8 + $0x8c] sm:$0xff]
    %v445 = vld [vmem:[#allocation8 + $0x94] sm:$0xff]
    %v446 = vld [vmem:[#allocation8 + $0x9c] sm:$0xf]
    %v447 = vld [vmem:[#allocation8 + $0xa0] sm:$0xff]
    %v448 = vld [vmem:[#allocation8 + $0xa8] sm:$0xff]
    %v449 = vld [vmem:[#allocation8 + $0xb0] sm:$0xf]
    %v450 = vld [vmem:[#allocation8 + $0xb4] sm:$0xff]
    %v451 = vld [vmem:[#allocation8 + $0xbc] sm:$0xff]
    %v452 = vld [vmem:[#allocation8 + $0xc4] sm:$0xf]
    %v453 = vld [vmem:[#allocation8 + $0xc8] sm:$0xff]
    %v454 = vld [vmem:[#allocation8 + $0xd0] sm:$0xff]
    %v455 = vld [vmem:[#allocation8 + $0xd8] sm:$0xf]
    %v456 = vld [vmem:[#allocation8 + $0xdc] sm:$0xff]
    %v457 = vld [vmem:[#allocation8 + $0xe4] sm:$0xff]
    %v458 = vld [vmem:[#allocation8 + $0xec] sm:$0xf]
    %v459 = vld [vmem:[#allocation8 + $0xf0] sm:$0xff]
    %v460 = vld [vmem:[#allocation8 + $0xf8] sm:$0xff]
    %v461 = vld [vmem:[#allocation8 + $0x100] sm:$0xf]
    %v462 = vld [vmem:[#allocation8 + $0x104] sm:$0xff]
    %v463 = vld [vmem:[#allocation8 + $0x10c] sm:$0xff]
    %v464 = vld [vmem:[#allocation8 + $0x114] sm:$0xf]
    %v465 = vld [vmem:[#allocation8 + $0x118] sm:$0xff]
    %v466 = vld [vmem:[#allocation8 + $0x120] sm:$0xff]
    %v467 = vld [vmem:[#allocation8 + $0x128] sm:$0xf]
    %v468 = vld [vmem:[#allocation8 + $0x12c] sm:$0xff]
    %v469 = vld [vmem:[#allocation8 + $0x134] sm:$0xff]
    %v470 = vld [vmem:[#allocation8 + $0x13c] sm:$0xf]
    %v471 = vld [vmem:[#allocation8 + $0x140] sm:$0xff]
    %v472 = vld [vmem:[#allocation8 + $0x148] sm:$0xff]
    %v473 = vld [vmem:[#allocation8 + $0x150] sm:$0xf]
    %v474 = vld [vmem:[#allocation8 + $0x154] sm:$0xff]
    %v475 = vld [vmem:[#allocation8 + $0x15c] sm:$0xff]
    %v476 = vld [vmem:[#allocation8 + $0x164] sm:$0xf]
    %v477 = vld [vmem:[#allocation8 + $0x168] sm:$0xff]
    %v478 = vld [vmem:[#allocation8 + $0x170] sm:$0xff]
    %v479 = vld [vmem:[#allocation8 + $0x178] sm:$0xf]
    %v480 = vld [vmem:[#allocation8 + $0x17c] sm:$0xff]
    %v481 = vld [vmem:[#allocation8 + $0x184] sm:$0xff]
    %v482 = vld [vmem:[#allocation8 + $0x18c] sm:$0xf]
    %v483 = vld [vmem:[#allocation8 + $0x190] sm:$0xff]
    %v484 = vld [vmem:[#allocation8 + $0x198] sm:$0xff]
    %v485 = vld [vmem:[#allocation8 + $0x1a0] sm:$0xf]
    %v486 = vld [vmem:[#allocation8 + $0x1a4] sm:$0xff]
    %v487 = vld [vmem:[#allocation8 + $0x1ac] sm:$0xff]
    %v488 = vld [vmem:[#allocation8 + $0x1b4] sm:$0xf]
    %v489 = vld [vmem:[#allocation8 + $0x1b8] sm:$0xff]
    %v490 = vld [vmem:[#allocation8 + $0x1c0] sm:$0xff]
    %v491 = vld [vmem:[#allocation8 + $0x1c8] sm:$0xf]
    %v492 = vld [vmem:[#allocation8 + $0x1cc] sm:$0xff]
    %v493 = vld [vmem:[#allocation8 + $0x1d4] sm:$0xff]
    %v494 = vld [vmem:[#allocation8 + $0x1dc] sm:$0xf]
    %v495 = vld [vmem:[#allocation8 + $0x1e0] sm:$0xff]
    %v496 = vld [vmem:[#allocation8 + $0x1e8] sm:$0xff]
    %v497 = vld [vmem:[#allocation8 + $0x1f0] sm:$0xf]
    %v498 = vld [vmem:[#allocation8 + $0x1f4] sm:$0xff]
    %v499 = vld [vmem:[#allocation8 + $0x1fc] sm:$0xff]
    %v500 = vld [vmem:[#allocation8 + $0x204] sm:$0xf]
    %v501 = vld [vmem:[#allocation8 + $0x208] sm:$0xff]
    %v502 = vld [vmem:[#allocation8 + $0x210] sm:$0xff]
    %v503 = vld [vmem:[#allocation8 + $0x218] sm:$0xf]
    %v504 = vld [vmem:[#allocation8 + $0x21c] sm:$0xff]
    %v505 = vld [vmem:[#allocation8 + $0x224] sm:$0xff]
    %v506 = vld [vmem:[#allocation8 + $0x22c] sm:$0xf]
    %v507 = vld [vmem:[#allocation8 + $0x230] sm:$0xff]
    %v508 = vld [vmem:[#allocation8 + $0x238] sm:$0xff]
    %v509 = vld [vmem:[#allocation8 + $0x240] sm:$0xf]
    %v510 = vld [vmem:[#allocation8 + $0x244] sm:$0xff]
    %v511 = vld [vmem:[#allocation8 + $0x24c] sm:$0xff]
    %v512 = vld [vmem:[#allocation8 + $0x254] sm:$0xf]
    %v513 = vld [vmem:[#allocation8 + $0x258] sm:$0xff]
    %v514 = vld [vmem:[#allocation8 + $0x260] sm:$0xff]
    %v515 = vld [vmem:[#allocation8 + $0x268] sm:$0xf]
    %v516 = vld [vmem:[#allocation8 + $0x26c] sm:$0xff]
    %v517 = vld [vmem:[#allocation8 + $0x274] sm:$0xff]
    %v518 = vld [vmem:[#allocation8 + $0x27c] sm:$0xf]
    %v519 = vld [vmem:[#allocation8 + $0x280] sm:$0xff]
    %v520 = vld [vmem:[#allocation8 + $0x288] sm:$0xff]
    %v521 = vld [vmem:[#allocation8 + $0x290] sm:$0xf]
    %v522 = vld [vmem:[#allocation8 + $0x294] sm:$0xff]
    %v523 = vld [vmem:[#allocation8 + $0x29c] sm:$0xff]
    %v524 = vld [vmem:[#allocation8 + $0x2a4] sm:$0xf]
    %v525 = vld [vmem:[#allocation8 + $0x2a8] sm:$0xff]
    %v526 = vld [vmem:[#allocation8 + $0x2b0] sm:$0xff]
    %v527 = vld [vmem:[#allocation8 + $0x2b8] sm:$0xf]
    %v528 = vld [vmem:[#allocation8 + $0x2bc] sm:$0xff]
    %v529 = vld [vmem:[#allocation8 + $0x2c4] sm:$0xff]
    %v530 = vld [vmem:[#allocation8 + $0x2cc] sm:$0xf]
    %v531 = vld [vmem:[#allocation8 + $0x2d0] sm:$0xff]
    %v532 = vld [vmem:[#allocation8 + $0x2d8] sm:$0xff]
    %v533 = vld [vmem:[#allocation8 + $0x2e0] sm:$0xf]
    %v534 = vld [vmem:[#allocation8 + $0x2e4] sm:$0xff]
    %v535 = vld [vmem:[#allocation8 + $0x2ec] sm:$0xff]
    %v536 = vld [vmem:[#allocation8 + $0x2f4] sm:$0xf]
    %v537 = vld [vmem:[#allocation8 + $0x2f8] sm:$0xff]
    %v538 = vld [vmem:[#allocation8 + $0x300] sm:$0xff]
    %v539 = vld [vmem:[#allocation8 + $0x308] sm:$0xf]
    %v540 = vld [vmem:[#allocation8 + $0x30c] sm:$0xff]
    %v541 = vld [vmem:[#allocation8 + $0x314] sm:$0xff]
    %v542 = vld [vmem:[#allocation8 + $0x31c] sm:$0xf]
    %v543 = vld [vmem:[#allocation8 + $0x320] sm:$0xff]
    %v544 = vld [vmem:[#allocation8 + $0x328] sm:$0xff]
    %v545 = vld [vmem:[#allocation8 + $0x330] sm:$0xf]
    %v546 = vld [vmem:[#allocation8 + $0x334] sm:$0xff]
    %v547 = vld [vmem:[#allocation8 + $0x33c] sm:$0xff]
    %v548 = vld [vmem:[#allocation8 + $0x344] sm:$0xf]
    %v549 = vld [vmem:[#allocation8 + $0x348] sm:$0xff]
    %v550 = vld [vmem:[#allocation8 + $0x350] sm:$0xff]
    %v551 = vld [vmem:[#allocation8 + $0x358] sm:$0xf]
    %v552 = vld [vmem:[#allocation8 + $0x35c] sm:$0xff]
    %v553 = vld [vmem:[#allocation8 + $0x364] sm:$0xff]
    %v554 = vld [vmem:[#allocation8 + $0x36c] sm:$0xf]
    %v555 = vld [vmem:[#allocation8 + $0x370] sm:$0xff]
    %v556 = vld [vmem:[#allocation8 + $0x378] sm:$0xff]
    %v557 = vld [vmem:[#allocation8 + $0x380] sm:$0xf]
    %v558 = vld [vmem:[#allocation8 + $0x384] sm:$0xff]
    %v559 = vld [vmem:[#allocation8 + $0x38c] sm:$0xff]
    %v560 = vld [vmem:[#allocation8 + $0x394] sm:$0xf]
    %v561 = vld [vmem:[#allocation8 + $0x398] sm:$0xff]
    %v562 = vld [vmem:[#allocation8 + $0x3a0] sm:$0xff]
    %v563 = vld [vmem:[#allocation8 + $0x3a8] sm:$0xf]
    %v564 = vld [vmem:[#allocation8 + $0x3ac] sm:$0xff]
    %v565 = vld [vmem:[#allocation8 + $0x3b4] sm:$0xff]
    %v566 = vld [vmem:[#allocation8 + $0x3bc] sm:$0xf]
    %v567 = vld [vmem:[#allocation8 + $0x3c0] sm:$0xff]
    %v568 = vld [vmem:[#allocation8 + $0x3c8] sm:$0xff]
    %v569 = vld [vmem:[#allocation8 + $0x3d0] sm:$0xf]
    %v570 = vld [vmem:[#allocation8 + $0x3d4] sm:$0xff]
    %v571 = vld [vmem:[#allocation8 + $0x3dc] sm:$0xff]
    %v572 = vld [vmem:[#allocation8 + $0x3e4] sm:$0xf]
    %v573 = vld [vmem:[#allocation8 + $0x3e8] sm:$0xff]
    %v574 = vld [vmem:[#allocation8 + $0x3f0] sm:$0xff]
    %v575 = vld [vmem:[#allocation8 + $0x3f8] sm:$0xf]
    %v576 = vld [vmem:[#allocation8 + $0x3fc] sm:$0xff]
    %v577 = vld [vmem:[#allocation8 + $0x404] sm:$0xff]
    %v578 = vld [vmem:[#allocation8 + $0x40c] sm:$0xf]
    %v579 = vld [vmem:[#allocation8 + $0x410] sm:$0xff]
    %v580 = vld [vmem:[#allocation8 + $0x418] sm:$0xff]
    %v581 = vld [vmem:[#allocation8 + $0x420] sm:$0xf]
    %v582 = vld [vmem:[#allocation8 + $0x424] sm:$0xff]
    %v583 = vld [vmem:[#allocation8 + $0x42c] sm:$0xff]
    %v584 = vld [vmem:[#allocation8 + $0x434] sm:$0xf]
    %v585 = vld [vmem:[#allocation8 + $0x438] sm:$0xff]
    %v586 = vld [vmem:[#allocation8 + $0x440] sm:$0xff]
    %v587 = vld [vmem:[#allocation8 + $0x448] sm:$0xf]
    %v588 = vld [vmem:[#allocation8 + $0x44c] sm:$0xff]
    %v589 = vld [vmem:[#allocation8 + $0x454] sm:$0xff]
    %v590 = vld [vmem:[#allocation8 + $0x45c] sm:$0xf]
    %v591 = vld [vmem:[#allocation8 + $0x460] sm:$0xff]
    %v592 = vld [vmem:[#allocation8 + $0x468] sm:$0xff]
    %v593 = vld [vmem:[#allocation8 + $0x470] sm:$0xf]
    %v594 = vld [vmem:[#allocation8 + $0x474] sm:$0xff]
    %v595 = vld [vmem:[#allocation8 + $0x47c] sm:$0xff]
    %v596 = vld [vmem:[#allocation8 + $0x484] sm:$0xf]
    %v597 = vld [vmem:[#allocation8 + $0x488] sm:$0xff]
    %v598 = vld [vmem:[#allocation8 + $0x490] sm:$0xff]
    %v599 = vld [vmem:[#allocation8 + $0x498] sm:$0xf]
    %v600 = vld [vmem:[#allocation8 + $0x49c] sm:$0xff]
    %v601 = vld [vmem:[#allocation8 + $0x4a4] sm:$0xff]
    %v602 = vld [vmem:[#allocation8 + $0x4ac] sm:$0xf]
    %v603 = vld [vmem:[#allocation8 + $0x4b0] sm:$0xff]
    %v604 = vld [vmem:[#allocation8 + $0x4b8] sm:$0xff]
    %v605 = vld [vmem:[#allocation8 + $0x4c0] sm:$0xf]
    %v606 = vld [vmem:[#allocation8 + $0x4c4] sm:$0xff]
    %v607 = vld [vmem:[#allocation8 + $0x4cc] sm:$0xff]
    %v608 = vld [vmem:[#allocation8 + $0x4d4] sm:$0xf]
    %v609 = vld [vmem:[#allocation8 + $0x4d8] sm:$0xff]
    %v610 = vld [vmem:[#allocation8 + $0x4e0] sm:$0xff]
    %v611 = vld [vmem:[#allocation8 + $0x4e8] sm:$0xf]
    %v612 = vld [vmem:[#allocation8 + $0x4ec] sm:$0xff]
    %v613 = vld [vmem:[#allocation8 + $0x4f4] sm:$0xff]
    %v614 = vld [vmem:[#allocation8 + $0x4fc] sm:$0xf]
    %v615 = vld [vmem:[#allocation8 + $0x500] sm:$0xff]
    %v616 = vld [vmem:[#allocation8 + $0x508] sm:$0xff]
    %v617 = vld [vmem:[#allocation8 + $0x510] sm:$0xf]
    %v618 = vld [vmem:[#allocation8 + $0x514] sm:$0xff]
    %v619 = vld [vmem:[#allocation8 + $0x51c] sm:$0xff]
    %v620 = vld [vmem:[#allocation8 + $0x524] sm:$0xf]
    %v621 = vld [vmem:[#allocation8 + $0x528] sm:$0xff]
    %v622 = vld [vmem:[#allocation8 + $0x530] sm:$0xff]
    %v623 = vld [vmem:[#allocation8 + $0x538] sm:$0xf]
    %v624 = vld [vmem:[#allocation8 + $0x53c] sm:$0xff]
    %v625 = vld [vmem:[#allocation8 + $0x544] sm:$0xff]
    %v626 = vld [vmem:[#allocation8 + $0x54c] sm:$0xf]
    %v627 = vld [vmem:[#allocation8 + $0x550] sm:$0xff]
    %v628 = vld [vmem:[#allocation8 + $0x558] sm:$0xff]
    %v629 = vld [vmem:[#allocation8 + $0x560] sm:$0xf]
    %v630 = vld [vmem:[#allocation8 + $0x564] sm:$0xff]
    %v631 = vld [vmem:[#allocation8 + $0x56c] sm:$0xff]
    %v632 = vld [vmem:[#allocation8 + $0x574] sm:$0xf]
    %v633 = vld [vmem:[#allocation8 + $0x578] sm:$0xff]
    %v634 = vld [vmem:[#allocation8 + $0x580] sm:$0xff]
    %v635 = vld [vmem:[#allocation8 + $0x588] sm:$0xf]
    %v636 = vld [vmem:[#allocation8 + $0x58c] sm:$0xff]
    %v637 = vld [vmem:[#allocation8 + $0x594] sm:$0xff]
    %v638 = vld [vmem:[#allocation8 + $0x59c] sm:$0xf]
    %v639 = vld [vmem:[#allocation8 + $0x5a0] sm:$0xff]
    %v640 = vld [vmem:[#allocation8 + $0x5a8] sm:$0xff]
    %v641 = vld [vmem:[#allocation8 + $0x5b0] sm:$0xf]
    %v642 = vld [vmem:[#allocation8 + $0x5b4] sm:$0xff]
    %v643 = vld [vmem:[#allocation8 + $0x5bc] sm:$0xff]
    %v644 = vld [vmem:[#allocation8 + $0x5c4] sm:$0xf]
    %v645 = vld [vmem:[#allocation8 + $0x5c8] sm:$0xff]
    %v646 = vld [vmem:[#allocation8 + $0x5d0] sm:$0xff]
    %v647 = vld [vmem:[#allocation8 + $0x5d8] sm:$0xf]
    %v648 = vld [vmem:[#allocation8 + $0x5dc] sm:$0xff]
    %v649 = vld [vmem:[#allocation8 + $0x5e4] sm:$0xff]
    %v650 = vld [vmem:[#allocation8 + $0x5ec] sm:$0xf]
    %v651 = vld [vmem:[#allocation8 + $0x5f0] sm:$0xff]
    %v652 = vld [vmem:[#allocation8 + $0x5f8] sm:$0xff]
    %v653 = vld [vmem:[#allocation8 + $0x600] sm:$0xf]
    %v654 = vld [vmem:[#allocation8 + $0x604] sm:$0xff]
    %v655 = vld [vmem:[#allocation8 + $0x60c] sm:$0xff]
    %v656 = vld [vmem:[#allocation8 + $0x614] sm:$0xf]
    %v657 = vld [vmem:[#allocation8 + $0x618] sm:$0xff]
    %v658 = vld [vmem:[#allocation8 + $0x620] sm:$0xff]
    %v659 = vld [vmem:[#allocation8 + $0x628] sm:$0xf]
    %v660 = vld [vmem:[#allocation8 + $0x62c] sm:$0xff]
    %v661 = vld [vmem:[#allocation8 + $0x634] sm:$0xff]
    %v662 = vld [vmem:[#allocation8 + $0x63c] sm:$0xf]
    %v663 = vld [vmem:[#allocation8 + $0x640] sm:$0xff]
    %v664 = vld [vmem:[#allocation8 + $0x648] sm:$0xff]
    %v665 = vld [vmem:[#allocation8 + $0x650] sm:$0xf]
    %v666 = vld [vmem:[#allocation8 + $0x654] sm:$0xff]
    %v667 = vld [vmem:[#allocation8 + $0x65c] sm:$0xff]
    %v668 = vld [vmem:[#allocation8 + $0x664] sm:$0xf]
    %v669 = vld [vmem:[#allocation8 + $0x668] sm:$0xff]
    %v670 = vld [vmem:[#allocation8 + $0x670] sm:$0xff]
    %v671 = vld [vmem:[#allocation8 + $0x678] sm:$0xf]
    %v672 = vld [vmem:[#allocation8 + $0x67c] sm:$0xff]
    %v673 = vld [vmem:[#allocation8 + $0x684] sm:$0xff]
    %v674 = vld [vmem:[#allocation8 + $0x68c] sm:$0xf]
    %v675 = vld [vmem:[#allocation8 + $0x690] sm:$0xff]
    %v676 = vld [vmem:[#allocation8 + $0x698] sm:$0xff]
    %v677 = vld [vmem:[#allocation8 + $0x6a0] sm:$0xf]
    %v678 = vld [vmem:[#allocation8 + $0x6a4] sm:$0xff]
    %v679 = vld [vmem:[#allocation8 + $0x6ac] sm:$0xff]
    %v680 = vld [vmem:[#allocation8 + $0x6b4] sm:$0xf]
    %v681 = vld [vmem:[#allocation8 + $0x6b8] sm:$0xff]
    %v682 = vld [vmem:[#allocation8 + $0x6c0] sm:$0xff]
    %v683 = vld [vmem:[#allocation8 + $0x6c8] sm:$0xf]
    %v684 = vld [vmem:[#allocation8 + $0x6cc] sm:$0xff]
    %v685 = vld [vmem:[#allocation8 + $0x6d4] sm:$0xff]
    %v686 = vld [vmem:[#allocation8 + $0x6dc] sm:$0xf]
    %v687 = vld [vmem:[#allocation8 + $0x6e0] sm:$0xff]
    %v688 = vld [vmem:[#allocation8 + $0x6e8] sm:$0xff]
    %v689 = vld [vmem:[#allocation8 + $0x6f0] sm:$0xf]
    %v690 = vld [vmem:[#allocation8 + $0x6f4] sm:$0xff]
    %v691 = vld [vmem:[#allocation8 + $0x6fc] sm:$0xff]
    %v692 = vld [vmem:[#allocation8 + $0x704] sm:$0xf]
    %v693 = vld [vmem:[#allocation8 + $0x708] sm:$0xff]
    %v694 = vld [vmem:[#allocation8 + $0x710] sm:$0xff]
    %v695 = vld [vmem:[#allocation8 + $0x718] sm:$0xf]
    %v696 = vld [vmem:[#allocation8 + $0x71c] sm:$0xff]
    %v697 = vld [vmem:[#allocation8 + $0x724] sm:$0xff]
    %v698 = vld [vmem:[#allocation8 + $0x72c] sm:$0xf]
    %v699 = vld [vmem:[#allocation8 + $0x730] sm:$0xff]
    %v700 = vld [vmem:[#allocation8 + $0x738] sm:$0xff]
    %v701 = vld [vmem:[#allocation8 + $0x740] sm:$0xf]
    %v702 = vld [vmem:[#allocation8 + $0x744] sm:$0xff]
    %v703 = vld [vmem:[#allocation8 + $0x74c] sm:$0xff]
    %v704 = vld [vmem:[#allocation8 + $0x754] sm:$0xf]
    %v705 = vld [vmem:[#allocation8 + $0x758] sm:$0xff]
    %v706 = vld [vmem:[#allocation8 + $0x760] sm:$0xff]
    %v707 = vld [vmem:[#allocation8 + $0x768] sm:$0xf]
    %v708 = vld [vmem:[#allocation8 + $0x76c] sm:$0xff]
    %v709 = vld [vmem:[#allocation8 + $0x774] sm:$0xff]
    %v710 = vld [vmem:[#allocation8 + $0x77c] sm:$0xf]
    %v711 = vld [vmem:[#allocation8 + $0x780] sm:$0xff]
    %v712 = vld [vmem:[#allocation8 + $0x788] sm:$0xff]
    %v713 = vld [vmem:[#allocation8 + $0x790] sm:$0xf]
    %v714 = vld [vmem:[#allocation8 + $0x794] sm:$0xff]
    %v715 = vld [vmem:[#allocation8 + $0x79c] sm:$0xff]
    %v716 = vld [vmem:[#allocation8 + $0x7a4] sm:$0xf]
    %v717 = vld [vmem:[#allocation8 + $0x7a8] sm:$0xff]
    %v718 = vld [vmem:[#allocation8 + $0x7b0] sm:$0xff]
    %v719 = vld [vmem:[#allocation8 + $0x7b8] sm:$0xf]
    %v720 = vld [vmem:[#allocation8 + $0x7bc] sm:$0xff]
    %v721 = vld [vmem:[#allocation8 + $0x7c4] sm:$0xff]
    %v722 = vld [vmem:[#allocation8 + $0x7cc] sm:$0xf]
    %v723 = vld [vmem:[#allocation8 + $0x7d0] sm:$0xff]
    %v724 = vld [vmem:[#allocation8 + $0x7d8] sm:$0xff]
    %v725 = vld [vmem:[#allocation8 + $0x7e0] sm:$0xf]
    %v726 = vld [vmem:[#allocation8 + $0x7e4] sm:$0xff]
    %v727 = vld [vmem:[#allocation8 + $0x7ec] sm:$0xff]
    %v728 = vld [vmem:[#allocation8 + $0x7f4] sm:$0xf]
    %v729 = vld [vmem:[#allocation8 + $0x7f8] sm:$0xff]
    %v730 = vld [vmem:[#allocation8 + $0x800] sm:$0xff]
    %v731 = vld [vmem:[#allocation8 + $0x808] sm:$0xf]
    %v732 = vld [vmem:[#allocation8 + $0x80c] sm:$0xff]
    %v733 = vld [vmem:[#allocation8 + $0x814] sm:$0xff]
    %v734 = vld [vmem:[#allocation8 + $0x81c] sm:$0xf]
    %v735 = vld [vmem:[#allocation8 + $0x820] sm:$0xff]
    %v736 = vld [vmem:[#allocation8 + $0x828] sm:$0xff]
    %v737 = vld [vmem:[#allocation8 + $0x830] sm:$0xf]
    %v738 = vld [vmem:[#allocation8 + $0x834] sm:$0xff]
    %v739 = vld [vmem:[#allocation8 + $0x83c] sm:$0xff]
    %v740 = vld [vmem:[#allocation8 + $0x844] sm:$0xf]
    %v741 = vld [vmem:[#allocation8 + $0x848] sm:$0xff]
    %v742 = vld [vmem:[#allocation8 + $0x850] sm:$0xff]
    %v743 = vld [vmem:[#allocation8 + $0x858] sm:$0xf]
    %v744 = vld [vmem:[#allocation8 + $0x85c] sm:$0xff]
    %v745 = vld [vmem:[#allocation8 + $0x864] sm:$0xff]
    %v746 = vld [vmem:[#allocation8 + $0x86c] sm:$0xf]
    %v747 = vld [vmem:[#allocation8 + $0x870] sm:$0xff]
    %v748 = vld [vmem:[#allocation8 + $0x878] sm:$0xff]
    %v749 = vld [vmem:[#allocation8 + $0x880] sm:$0xf]
    %v750 = vld [vmem:[#allocation8 + $0x884] sm:$0xff]
    %v751 = vld [vmem:[#allocation8 + $0x88c] sm:$0xff]
    %v752 = vld [vmem:[#allocation8 + $0x894] sm:$0xf]
    %v753 = vld [vmem:[#allocation8 + $0x898] sm:$0xff]
    %v754 = vld [vmem:[#allocation8 + $0x8a0] sm:$0xff]
    %v755 = vld [vmem:[#allocation8 + $0x8a8] sm:$0xf]
    %v756 = vld [vmem:[#allocation8 + $0x8ac] sm:$0xff]
    %v757 = vld [vmem:[#allocation8 + $0x8b4] sm:$0xff]
    %v758 = vld [vmem:[#allocation8 + $0x8bc] sm:$0xf]
    %v759 = vld [vmem:[#allocation10] sm:$0x1f]
    %v761 = vlaneseq
    %v762 = vshrl.u32 %v761, 7
    %v763 = vsub.s32 0, %v762
    %v764 = vrot.slane %v759, %v763
    %v765 = vlaneseq
    %v766 = vshrl.u32 %v765, 7
    %v767 = vsub.s32 1, %v766
    %v768 = vrot.slane %v759, %v767
    %v769 = vlaneseq
    %v770 = vshrl.u32 %v769, 7
    %v771 = vsub.s32 2, %v770
    %v772 = vrot.slane %v759, %v771
    %v773 = vlaneseq
    %v774 = vshrl.u32 %v773, 7
    %v775 = vsub.s32 3, %v774
    %v776 = vrot.slane %v759, %v775
    %v777 = vlaneseq
    %v778 = vshrl.u32 %v777, 7
    %v779 = vsub.s32 4, %v778
    %v780 = vrot.slane %v759, %v779
    %v1122 = vunpack.c.l.b16 %v423
    %v1123 = vunpack.c.h.b16 %v423
    %v1124 = vunpack.c.l.b16 %v424
    %v1125 = vunpack.c.h.b16 %v424
    %v1126 = vunpack.c.l.b16 %v425
    %v1127 = vunpack.c.l.b16 %v426
    %v1128 = vunpack.c.h.b16 %v426
    %v1129 = vunpack.c.l.b16 %v427
    %v1130 = vunpack.c.h.b16 %v427
    %v1131 = vunpack.c.l.b16 %v428
    %v1132 = vunpack.c.l.b16 %v429
    %v1133 = vunpack.c.h.b16 %v429
    %v1134 = vunpack.c.l.b16 %v430
    %v1135 = vunpack.c.h.b16 %v430
    %v1136 = vunpack.c.l.b16 %v431
    %v1137 = vunpack.c.l.b16 %v432
    %v1138 = vunpack.c.h.b16 %v432
    %v1139 = vunpack.c.l.b16 %v433
    %v1140 = vunpack.c.h.b16 %v433
    %v1141 = vunpack.c.l.b16 %v434
    %v1142 = vunpack.c.l.b16 %v435
    %v1143 = vunpack.c.h.b16 %v435
    %v1144 = vunpack.c.l.b16 %v436
    %v1145 = vunpack.c.h.b16 %v436
    %v1146 = vunpack.c.l.b16 %v437
    %v1147 = vunpack.c.l.b16 %v438
    %v1148 = vunpack.c.h.b16 %v438
    %v1149 = vunpack.c.l.b16 %v439
    %v1150 = vunpack.c.h.b16 %v439
    %v1151 = vunpack.c.l.b16 %v440
    %v1152 = vunpack.c.l.b16 %v441
    %v1153 = vunpack.c.h.b16 %v441
    %v1154 = vunpack.c.l.b16 %v442
    %v1155 = vunpack.c.h.b16 %v442
    %v1156 = vunpack.c.l.b16 %v443
    %v1157 = vunpack.c.l.b16 %v444
    %v1158 = vunpack.c.h.b16 %v444
    %v1159 = vunpack.c.l.b16 %v445
    %v1160 = vunpack.c.h.b16 %v445
    %v1161 = vunpack.c.l.b16 %v446
    %v1162 = vunpack.c.l.b16 %v447
    %v1163 = vunpack.c.h.b16 %v447
    %v1164 = vunpack.c.l.b16 %v448
    %v1165 = vunpack.c.h.b16 %v448
    %v1166 = vunpack.c.l.b16 %v449
    %v1167 = vunpack.c.l.b16 %v450
    %v1168 = vunpack.c.h.b16 %v450
    %v1169 = vunpack.c.l.b16 %v451
    %v1170 = vunpack.c.h.b16 %v451
    %v1171 = vunpack.c.l.b16 %v452
    %v1172 = vunpack.c.l.b16 %v453
    %v1173 = vunpack.c.h.b16 %v453
    %v1174 = vunpack.c.l.b16 %v454
    %v1175 = vunpack.c.h.b16 %v454
    %v1176 = vunpack.c.l.b16 %v455
    %v1177 = vunpack.c.l.b16 %v456
    %v1178 = vunpack.c.h.b16 %v456
    %v1179 = vunpack.c.l.b16 %v457
    %v1180 = vunpack.c.h.b16 %v457
    %v1181 = vunpack.c.l.b16 %v458
    %v1182 = vunpack.c.l.b16 %v459
    %v1183 = vunpack.c.h.b16 %v459
    %v1184 = vunpack.c.l.b16 %v460
    %v1185 = vunpack.c.h.b16 %v460
    %v1186 = vunpack.c.l.b16 %v461
    %v1187 = vunpack.c.l.b16 %v462
    %v1188 = vunpack.c.h.b16 %v462
    %v1189 = vunpack.c.l.b16 %v463
    %v1190 = vunpack.c.h.b16 %v463
    %v1191 = vunpack.c.l.b16 %v464
    %v1192 = vunpack.c.l.b16 %v465
    %v1193 = vunpack.c.h.b16 %v465
    %v1194 = vunpack.c.l.b16 %v466
    %v1195 = vunpack.c.h.b16 %v466
    %v1196 = vunpack.c.l.b16 %v467
    %v1197 = vunpack.c.l.b16 %v468
    %v1198 = vunpack.c.h.b16 %v468
    %v1199 = vunpack.c.l.b16 %v469
    %v1200 = vunpack.c.h.b16 %v469
    %v1201 = vunpack.c.l.b16 %v470
    %v1202 = vunpack.c.l.b16 %v471
    %v1203 = vunpack.c.h.b16 %v471
    %v1204 = vunpack.c.l.b16 %v472
    %v1205 = vunpack.c.h.b16 %v472
    %v1206 = vunpack.c.l.b16 %v473
    %v1207 = vunpack.c.l.b16 %v474
    %v1208 = vunpack.c.h.b16 %v474
    %v1209 = vunpack.c.l.b16 %v475
    %v1210 = vunpack.c.h.b16 %v475
    %v1211 = vunpack.c.l.b16 %v476
    %v1212 = vunpack.c.l.b16 %v477
    %v1213 = vunpack.c.h.b16 %v477
    %v1214 = vunpack.c.l.b16 %v478
    %v1215 = vunpack.c.h.b16 %v478
    %v1216 = vunpack.c.l.b16 %v479
    %v1217 = vunpack.c.l.b16 %v480
    %v1218 = vunpack.c.h.b16 %v480
    %v1219 = vunpack.c.l.b16 %v481
    %v1220 = vunpack.c.h.b16 %v481
    %v1221 = vunpack.c.l.b16 %v482
    %v1222 = vunpack.c.l.b16 %v483
    %v1223 = vunpack.c.h.b16 %v483
    %v1224 = vunpack.c.l.b16 %v484
    %v1225 = vunpack.c.h.b16 %v484
    %v1226 = vunpack.c.l.b16 %v485
    %v1227 = vunpack.c.l.b16 %v486
    %v1228 = vunpack.c.h.b16 %v486
    %v1229 = vunpack.c.l.b16 %v487
    %v1230 = vunpack.c.h.b16 %v487
    %v1231 = vunpack.c.l.b16 %v488
    %v1232 = vunpack.c.l.b16 %v489
    %v1233 = vunpack.c.h.b16 %v489
    %v1234 = vunpack.c.l.b16 %v490
    %v1235 = vunpack.c.h.b16 %v490
    %v1236 = vunpack.c.l.b16 %v491
    %v1237 = vunpack.c.l.b16 %v492
    %v1238 = vunpack.c.h.b16 %v492
    %v1239 = vunpack.c.l.b16 %v493
    %v1240 = vunpack.c.h.b16 %v493
    %v1241 = vunpack.c.l.b16 %v494
    %v1242 = vunpack.c.l.b16 %v495
    %v1243 = vunpack.c.h.b16 %v495
    %v1244 = vunpack.c.l.b16 %v496
    %v1245 = vunpack.c.h.b16 %v496
    %v1246 = vunpack.c.l.b16 %v497
    %v1247 = vunpack.c.l.b16 %v498
    %v1248 = vunpack.c.h.b16 %v498
    %v1249 = vunpack.c.l.b16 %v499
    %v1250 = vunpack.c.h.b16 %v499
    %v1251 = vunpack.c.l.b16 %v500
    %v1252 = vunpack.c.l.b16 %v501
    %v1253 = vunpack.c.h.b16 %v501
    %v1254 = vunpack.c.l.b16 %v502
    %v1255 = vunpack.c.h.b16 %v502
    %v1256 = vunpack.c.l.b16 %v503
    %v1257 = vunpack.c.l.b16 %v504
    %v1258 = vunpack.c.h.b16 %v504
    %v1259 = vunpack.c.l.b16 %v505
    %v1260 = vunpack.c.h.b16 %v505
    %v1261 = vunpack.c.l.b16 %v506
    %v1262 = vunpack.c.l.b16 %v507
    %v1263 = vunpack.c.h.b16 %v507
    %v1264 = vunpack.c.l.b16 %v508
    %v1265 = vunpack.c.h.b16 %v508
    %v1266 = vunpack.c.l.b16 %v509
    %v1267 = vunpack.c.l.b16 %v510
    %v1268 = vunpack.c.h.b16 %v510
    %v1269 = vunpack.c.l.b16 %v511
    %v1270 = vunpack.c.h.b16 %v511
    %v1271 = vunpack.c.l.b16 %v512
    %v1272 = vunpack.c.l.b16 %v513
    %v1273 = vunpack.c.h.b16 %v513
    %v1274 = vunpack.c.l.b16 %v514
    %v1275 = vunpack.c.h.b16 %v514
    %v1276 = vunpack.c.l.b16 %v515
    %v1277 = vunpack.c.l.b16 %v516
    %v1278 = vunpack.c.h.b16 %v516
    %v1279 = vunpack.c.l.b16 %v517
    %v1280 = vunpack.c.h.b16 %v517
    %v1281 = vunpack.c.l.b16 %v518
    %v1282 = vunpack.c.l.b16 %v519
    %v1283 = vunpack.c.h.b16 %v519
    %v1284 = vunpack.c.l.b16 %v520
    %v1285 = vunpack.c.h.b16 %v520
    %v1286 = vunpack.c.l.b16 %v521
    %v1287 = vunpack.c.l.b16 %v522
    %v1288 = vunpack.c.h.b16 %v522
    %v1289 = vunpack.c.l.b16 %v523
    %v1290 = vunpack.c.h.b16 %v523
    %v1291 = vunpack.c.l.b16 %v524
    %v1292 = vunpack.c.l.b16 %v525
    %v1293 = vunpack.c.h.b16 %v525
    %v1294 = vunpack.c.l.b16 %v526
    %v1295 = vunpack.c.h.b16 %v526
    %v1296 = vunpack.c.l.b16 %v527
    %v1297 = vunpack.c.l.b16 %v528
    %v1298 = vunpack.c.h.b16 %v528
    %v1299 = vunpack.c.l.b16 %v529
    %v1300 = vunpack.c.h.b16 %v529
    %v1301 = vunpack.c.l.b16 %v530
    %v1302 = vunpack.c.l.b16 %v531
    %v1303 = vunpack.c.h.b16 %v531
    %v1304 = vunpack.c.l.b16 %v532
    %v1305 = vunpack.c.h.b16 %v532
    %v1306 = vunpack.c.l.b16 %v533
    %v1307 = vunpack.c.l.b16 %v534
    %v1308 = vunpack.c.h.b16 %v534
    %v1309 = vunpack.c.l.b16 %v535
    %v1310 = vunpack.c.h.b16 %v535
    %v1311 = vunpack.c.l.b16 %v536
    %v1312 = vunpack.c.l.b16 %v537
    %v1313 = vunpack.c.h.b16 %v537
    %v1314 = vunpack.c.l.b16 %v538
    %v1315 = vunpack.c.h.b16 %v538
    %v1316 = vunpack.c.l.b16 %v539
    %v1317 = vunpack.c.l.b16 %v540
    %v1318 = vunpack.c.h.b16 %v540
    %v1319 = vunpack.c.l.b16 %v541
    %v1320 = vunpack.c.h.b16 %v541
    %v1321 = vunpack.c.l.b16 %v542
    %v1322 = vunpack.c.l.b16 %v543
    %v1323 = vunpack.c.h.b16 %v543
    %v1324 = vunpack.c.l.b16 %v544
    %v1325 = vunpack.c.h.b16 %v544
    %v1326 = vunpack.c.l.b16 %v545
    %v1327 = vunpack.c.l.b16 %v546
    %v1328 = vunpack.c.h.b16 %v546
    %v1329 = vunpack.c.l.b16 %v547
    %v1330 = vunpack.c.h.b16 %v547
    %v1331 = vunpack.c.l.b16 %v548
    %v1332 = vunpack.c.l.b16 %v549
    %v1333 = vunpack.c.h.b16 %v549
    %v1334 = vunpack.c.l.b16 %v550
    %v1335 = vunpack.c.h.b16 %v550
    %v1336 = vunpack.c.l.b16 %v551
    %v1337 = vunpack.c.l.b16 %v552
    %v1338 = vunpack.c.h.b16 %v552
    %v1339 = vunpack.c.l.b16 %v553
    %v1340 = vunpack.c.h.b16 %v553
    %v1341 = vunpack.c.l.b16 %v554
    %v1342 = vunpack.c.l.b16 %v555
    %v1343 = vunpack.c.h.b16 %v555
    %v1344 = vunpack.c.l.b16 %v556
    %v1345 = vunpack.c.h.b16 %v556
    %v1346 = vunpack.c.l.b16 %v557
    %v1347 = vunpack.c.l.b16 %v558
    %v1348 = vunpack.c.h.b16 %v558
    %v1349 = vunpack.c.l.b16 %v559
    %v1350 = vunpack.c.h.b16 %v559
    %v1351 = vunpack.c.l.b16 %v560
    %v1352 = vunpack.c.l.b16 %v561
    %v1353 = vunpack.c.h.b16 %v561
    %v1354 = vunpack.c.l.b16 %v562
    %v1355 = vunpack.c.h.b16 %v562
    %v1356 = vunpack.c.l.b16 %v563
    %v1357 = vunpack.c.l.b16 %v564
    %v1358 = vunpack.c.h.b16 %v564
    %v1359 = vunpack.c.l.b16 %v565
    %v1360 = vunpack.c.h.b16 %v565
    %v1361 = vunpack.c.l.b16 %v566
    %v1362 = vunpack.c.l.b16 %v567
    %v1363 = vunpack.c.h.b16 %v567
    %v1364 = vunpack.c.l.b16 %v568
    %v1365 = vunpack.c.h.b16 %v568
    %v1366 = vunpack.c.l.b16 %v569
    %v1367 = vunpack.c.l.b16 %v570
    %v1368 = vunpack.c.h.b16 %v570
    %v1369 = vunpack.c.l.b16 %v571
    %v1370 = vunpack.c.h.b16 %v571
    %v1371 = vunpack.c.l.b16 %v572
    %v1372 = vunpack.c.l.b16 %v573
    %v1373 = vunpack.c.h.b16 %v573
    %v1374 = vunpack.c.l.b16 %v574
    %v1375 = vunpack.c.h.b16 %v574
    %v1376 = vunpack.c.l.b16 %v575
    %v1377 = vunpack.c.l.b16 %v576
    %v1378 = vunpack.c.h.b16 %v576
    %v1379 = vunpack.c.l.b16 %v577
    %v1380 = vunpack.c.h.b16 %v577
    %v1381 = vunpack.c.l.b16 %v578
    %v1382 = vunpack.c.l.b16 %v579
    %v1383 = vunpack.c.h.b16 %v579
    %v1384 = vunpack.c.l.b16 %v580
    %v1385 = vunpack.c.h.b16 %v580
    %v1386 = vunpack.c.l.b16 %v581
    %v1387 = vunpack.c.l.b16 %v582
    %v1388 = vunpack.c.h.b16 %v582
    %v1389 = vunpack.c.l.b16 %v583
    %v1390 = vunpack.c.h.b16 %v583
    %v1391 = vunpack.c.l.b16 %v584
    %v1392 = vunpack.c.l.b16 %v585
    %v1393 = vunpack.c.h.b16 %v585
    %v1394 = vunpack.c.l.b16 %v586
    %v1395 = vunpack.c.h.b16 %v586
    %v1396 = vunpack.c.l.b16 %v587
    %v1397 = vunpack.c.l.b16 %v588
    %v1398 = vunpack.c.h.b16 %v588
    %v1399 = vunpack.c.l.b16 %v589
    %v1400 = vunpack.c.h.b16 %v589
    %v1401 = vunpack.c.l.b16 %v590
    %v1402 = vunpack.c.l.b16 %v591
    %v1403 = vunpack.c.h.b16 %v591
    %v1404 = vunpack.c.l.b16 %v592
    %v1405 = vunpack.c.h.b16 %v592
    %v1406 = vunpack.c.l.b16 %v593
    %v1407 = vunpack.c.l.b16 %v594
    %v1408 = vunpack.c.h.b16 %v594
    %v1409 = vunpack.c.l.b16 %v595
    %v1410 = vunpack.c.h.b16 %v595
    %v1411 = vunpack.c.l.b16 %v596
    %v1412 = vunpack.c.l.b16 %v597
    %v1413 = vunpack.c.h.b16 %v597
    %v1414 = vunpack.c.l.b16 %v598
    %v1415 = vunpack.c.h.b16 %v598
    %v1416 = vunpack.c.l.b16 %v599
    %v1417 = vunpack.c.l.b16 %v600
    %v1418 = vunpack.c.h.b16 %v600
    %v1419 = vunpack.c.l.b16 %v601
    %v1420 = vunpack.c.h.b16 %v601
    %v1421 = vunpack.c.l.b16 %v602
    %v1422 = vunpack.c.l.b16 %v603
    %v1423 = vunpack.c.h.b16 %v603
    %v1424 = vunpack.c.l.b16 %v604
    %v1425 = vunpack.c.h.b16 %v604
    %v1426 = vunpack.c.l.b16 %v605
    %v1427 = vunpack.c.l.b16 %v606
    %v1428 = vunpack.c.h.b16 %v606
    %v1429 = vunpack.c.l.b16 %v607
    %v1430 = vunpack.c.h.b16 %v607
    %v1431 = vunpack.c.l.b16 %v608
    %v1432 = vunpack.c.l.b16 %v609
    %v1433 = vunpack.c.h.b16 %v609
    %v1434 = vunpack.c.l.b16 %v610
    %v1435 = vunpack.c.h.b16 %v610
    %v1436 = vunpack.c.l.b16 %v611
    %v1437 = vunpack.c.l.b16 %v612
    %v1438 = vunpack.c.h.b16 %v612
    %v1439 = vunpack.c.l.b16 %v613
    %v1440 = vunpack.c.h.b16 %v613
    %v1441 = vunpack.c.l.b16 %v614
    %v1442 = vunpack.c.l.b16 %v615
    %v1443 = vunpack.c.h.b16 %v615
    %v1444 = vunpack.c.l.b16 %v616
    %v1445 = vunpack.c.h.b16 %v616
    %v1446 = vunpack.c.l.b16 %v617
    %v1447 = vunpack.c.l.b16 %v618
    %v1448 = vunpack.c.h.b16 %v618
    %v1449 = vunpack.c.l.b16 %v619
    %v1450 = vunpack.c.h.b16 %v619
    %v1451 = vunpack.c.l.b16 %v620
    %v1452 = vunpack.c.l.b16 %v621
    %v1453 = vunpack.c.h.b16 %v621
    %v1454 = vunpack.c.l.b16 %v622
    %v1455 = vunpack.c.h.b16 %v622
    %v1456 = vunpack.c.l.b16 %v623
    %v1457 = vunpack.c.l.b16 %v624
    %v1458 = vunpack.c.h.b16 %v624
    %v1459 = vunpack.c.l.b16 %v625
    %v1460 = vunpack.c.h.b16 %v625
    %v1461 = vunpack.c.l.b16 %v626
    %v1462 = vunpack.c.l.b16 %v627
    %v1463 = vunpack.c.h.b16 %v627
    %v1464 = vunpack.c.l.b16 %v628
    %v1465 = vunpack.c.h.b16 %v628
    %v1466 = vunpack.c.l.b16 %v629
    %v1467 = vunpack.c.l.b16 %v630
    %v1468 = vunpack.c.h.b16 %v630
    %v1469 = vunpack.c.l.b16 %v631
    %v1470 = vunpack.c.h.b16 %v631
    %v1471 = vunpack.c.l.b16 %v632
    %v1472 = vunpack.c.l.b16 %v633
    %v1473 = vunpack.c.h.b16 %v633
    %v1474 = vunpack.c.l.b16 %v634
    %v1475 = vunpack.c.h.b16 %v634
    %v1476 = vunpack.c.l.b16 %v635
    %v1477 = vunpack.c.l.b16 %v636
    %v1478 = vunpack.c.h.b16 %v636
    %v1479 = vunpack.c.l.b16 %v637
    %v1480 = vunpack.c.h.b16 %v637
    %v1481 = vunpack.c.l.b16 %v638
    %v1482 = vunpack.c.l.b16 %v639
    %v1483 = vunpack.c.h.b16 %v639
    %v1484 = vunpack.c.l.b16 %v640
    %v1485 = vunpack.c.h.b16 %v640
    %v1486 = vunpack.c.l.b16 %v641
    %v1487 = vunpack.c.l.b16 %v642
    %v1488 = vunpack.c.h.b16 %v642
    %v1489 = vunpack.c.l.b16 %v643
    %v1490 = vunpack.c.h.b16 %v643
    %v1491 = vunpack.c.l.b16 %v644
    %v1492 = vunpack.c.l.b16 %v645
    %v1493 = vunpack.c.h.b16 %v645
    %v1494 = vunpack.c.l.b16 %v646
    %v1495 = vunpack.c.h.b16 %v646
    %v1496 = vunpack.c.l.b16 %v647
    %v1497 = vunpack.c.l.b16 %v648
    %v1498 = vunpack.c.h.b16 %v648
    %v1499 = vunpack.c.l.b16 %v649
    %v1500 = vunpack.c.h.b16 %v649
    %v1501 = vunpack.c.l.b16 %v650
    %v1502 = vunpack.c.l.b16 %v651
    %v1503 = vunpack.c.h.b16 %v651
    %v1504 = vunpack.c.l.b16 %v652
    %v1505 = vunpack.c.h.b16 %v652
    %v1506 = vunpack.c.l.b16 %v653
    %v1507 = vunpack.c.l.b16 %v654
    %v1508 = vunpack.c.h.b16 %v654
    %v1509 = vunpack.c.l.b16 %v655
    %v1510 = vunpack.c.h.b16 %v655
    %v1511 = vunpack.c.l.b16 %v656
    %v1512 = vunpack.c.l.b16 %v657
    %v1513 = vunpack.c.h.b16 %v657
    %v1514 = vunpack.c.l.b16 %v658
    %v1515 = vunpack.c.h.b16 %v658
    %v1516 = vunpack.c.l.b16 %v659
    %v1517 = vunpack.c.l.b16 %v660
    %v1518 = vunpack.c.h.b16 %v660
    %v1519 = vunpack.c.l.b16 %v661
    %v1520 = vunpack.c.h.b16 %v661
    %v1521 = vunpack.c.l.b16 %v662
    %v1522 = vunpack.c.l.b16 %v663
    %v1523 = vunpack.c.h.b16 %v663
    %v1524 = vunpack.c.l.b16 %v664
    %v1525 = vunpack.c.h.b16 %v664
    %v1526 = vunpack.c.l.b16 %v665
    %v1527 = vunpack.c.l.b16 %v666
    %v1528 = vunpack.c.h.b16 %v666
    %v1529 = vunpack.c.l.b16 %v667
    %v1530 = vunpack.c.h.b16 %v667
    %v1531 = vunpack.c.l.b16 %v668
    %v1532 = vunpack.c.l.b16 %v669
    %v1533 = vunpack.c.h.b16 %v669
    %v1534 = vunpack.c.l.b16 %v670
    %v1535 = vunpack.c.h.b16 %v670
    %v1536 = vunpack.c.l.b16 %v671
    %v1537 = vunpack.c.l.b16 %v672
    %v1538 = vunpack.c.h.b16 %v672
    %v1539 = vunpack.c.l.b16 %v673
    %v1540 = vunpack.c.h.b16 %v673
    %v1541 = vunpack.c.l.b16 %v674
    %v1542 = vunpack.c.l.b16 %v675
    %v1543 = vunpack.c.h.b16 %v675
    %v1544 = vunpack.c.l.b16 %v676
    %v1545 = vunpack.c.h.b16 %v676
    %v1546 = vunpack.c.l.b16 %v677
    %v1547 = vunpack.c.l.b16 %v678
    %v1548 = vunpack.c.h.b16 %v678
    %v1549 = vunpack.c.l.b16 %v679
    %v1550 = vunpack.c.h.b16 %v679
    %v1551 = vunpack.c.l.b16 %v680
    %v1552 = vunpack.c.l.b16 %v681
    %v1553 = vunpack.c.h.b16 %v681
    %v1554 = vunpack.c.l.b16 %v682
    %v1555 = vunpack.c.h.b16 %v682
    %v1556 = vunpack.c.l.b16 %v683
    %v1557 = vunpack.c.l.b16 %v684
    %v1558 = vunpack.c.h.b16 %v684
    %v1559 = vunpack.c.l.b16 %v685
    %v1560 = vunpack.c.h.b16 %v685
    %v1561 = vunpack.c.l.b16 %v686
    %v1562 = vunpack.c.l.b16 %v687
    %v1563 = vunpack.c.h.b16 %v687
    %v1564 = vunpack.c.l.b16 %v688
    %v1565 = vunpack.c.h.b16 %v688
    %v1566 = vunpack.c.l.b16 %v689
    %v1567 = vunpack.c.l.b16 %v690
    %v1568 = vunpack.c.h.b16 %v690
    %v1569 = vunpack.c.l.b16 %v691
    %v1570 = vunpack.c.h.b16 %v691
    %v1571 = vunpack.c.l.b16 %v692
    %v1572 = vunpack.c.l.b16 %v693
    %v1573 = vunpack.c.h.b16 %v693
    %v1574 = vunpack.c.l.b16 %v694
    %v1575 = vunpack.c.h.b16 %v694
    %v1576 = vunpack.c.l.b16 %v695
    %v1577 = vunpack.c.l.b16 %v696
    %v1578 = vunpack.c.h.b16 %v696
    %v1579 = vunpack.c.l.b16 %v697
    %v1580 = vunpack.c.h.b16 %v697
    %v1581 = vunpack.c.l.b16 %v698
    %v1582 = vunpack.c.l.b16 %v699
    %v1583 = vunpack.c.h.b16 %v699
    %v1584 = vunpack.c.l.b16 %v700
    %v1585 = vunpack.c.h.b16 %v700
    %v1586 = vunpack.c.l.b16 %v701
    %v1587 = vunpack.c.l.b16 %v702
    %v1588 = vunpack.c.h.b16 %v702
    %v1589 = vunpack.c.l.b16 %v703
    %v1590 = vunpack.c.h.b16 %v703
    %v1591 = vunpack.c.l.b16 %v704
    %v1592 = vunpack.c.l.b16 %v705
    %v1593 = vunpack.c.h.b16 %v705
    %v1594 = vunpack.c.l.b16 %v706
    %v1595 = vunpack.c.h.b16 %v706
    %v1596 = vunpack.c.l.b16 %v707
    %v1597 = vunpack.c.l.b16 %v708
    %v1598 = vunpack.c.h.b16 %v708
    %v1599 = vunpack.c.l.b16 %v709
    %v1600 = vunpack.c.h.b16 %v709
    %v1601 = vunpack.c.l.b16 %v710
    %v1602 = vunpack.c.l.b16 %v711
    %v1603 = vunpack.c.h.b16 %v711
    %v1604 = vunpack.c.l.b16 %v712
    %v1605 = vunpack.c.h.b16 %v712
    %v1606 = vunpack.c.l.b16 %v713
    %v1607 = vunpack.c.l.b16 %v714
    %v1608 = vunpack.c.h.b16 %v714
    %v1609 = vunpack.c.l.b16 %v715
    %v1610 = vunpack.c.h.b16 %v715
    %v1611 = vunpack.c.l.b16 %v716
    %v1612 = vunpack.c.l.b16 %v717
    %v1613 = vunpack.c.h.b16 %v717
    %v1614 = vunpack.c.l.b16 %v718
    %v1615 = vunpack.c.h.b16 %v718
    %v1616 = vunpack.c.l.b16 %v719
    %v1617 = vunpack.c.l.b16 %v720
    %v1618 = vunpack.c.h.b16 %v720
    %v1619 = vunpack.c.l.b16 %v721
    %v1620 = vunpack.c.h.b16 %v721
    %v1621 = vunpack.c.l.b16 %v722
    %v1622 = vunpack.c.l.b16 %v723
    %v1623 = vunpack.c.h.b16 %v723
    %v1624 = vunpack.c.l.b16 %v724
    %v1625 = vunpack.c.h.b16 %v724
    %v1626 = vunpack.c.l.b16 %v725
    %v1627 = vunpack.c.l.b16 %v726
    %v1628 = vunpack.c.h.b16 %v726
    %v1629 = vunpack.c.l.b16 %v727
    %v1630 = vunpack.c.h.b16 %v727
    %v1631 = vunpack.c.l.b16 %v728
    %v1632 = vunpack.c.l.b16 %v729
    %v1633 = vunpack.c.h.b16 %v729
    %v1634 = vunpack.c.l.b16 %v730
    %v1635 = vunpack.c.h.b16 %v730
    %v1636 = vunpack.c.l.b16 %v731
    %v1637 = vunpack.c.l.b16 %v732
    %v1638 = vunpack.c.h.b16 %v732
    %v1639 = vunpack.c.l.b16 %v733
    %v1640 = vunpack.c.h.b16 %v733
    %v1641 = vunpack.c.l.b16 %v734
    %v1642 = vunpack.c.l.b16 %v735
    %v1643 = vunpack.c.h.b16 %v735
    %v1644 = vunpack.c.l.b16 %v736
    %v1645 = vunpack.c.h.b16 %v736
    %v1646 = vunpack.c.l.b16 %v737
    %v1647 = vunpack.c.l.b16 %v738
    %v1648 = vunpack.c.h.b16 %v738
    %v1649 = vunpack.c.l.b16 %v739
    %v1650 = vunpack.c.h.b16 %v739
    %v1651 = vunpack.c.l.b16 %v740
    %v1652 = vunpack.c.l.b16 %v741
    %v1653 = vunpack.c.h.b16 %v741
    %v1654 = vunpack.c.l.b16 %v742
    %v1655 = vunpack.c.h.b16 %v742
    %v1656 = vunpack.c.l.b16 %v743
    %v1657 = vunpack.c.l.b16 %v744
    %v1658 = vunpack.c.h.b16 %v744
    %v1659 = vunpack.c.l.b16 %v745
    %v1660 = vunpack.c.h.b16 %v745
    %v1661 = vunpack.c.l.b16 %v746
    %v1662 = vunpack.c.l.b16 %v747
    %v1663 = vunpack.c.h.b16 %v747
    %v1664 = vunpack.c.l.b16 %v748
    %v1665 = vunpack.c.h.b16 %v748
    %v1666 = vunpack.c.l.b16 %v749
    %v1667 = vunpack.c.l.b16 %v750
    %v1668 = vunpack.c.h.b16 %v750
    %v1669 = vunpack.c.l.b16 %v751
    %v1670 = vunpack.c.h.b16 %v751
    %v1671 = vunpack.c.l.b16 %v752
    %v1672 = vunpack.c.l.b16 %v753
    %v1673 = vunpack.c.h.b16 %v753
    %v1674 = vunpack.c.l.b16 %v754
    %v1675 = vunpack.c.h.b16 %v754
    %v1676 = vunpack.c.l.b16 %v755
    %v1677 = vunpack.c.l.b16 %v756
    %v1678 = vunpack.c.h.b16 %v756
    %v1679 = vunpack.c.l.b16 %v757
    %v1680 = vunpack.c.h.b16 %v757
    %v1681 = vunpack.c.l.b16 %v758
    %v1682 = vpack.c.b16 %v1127, %v1122
    %v1683 = vpack.c.b16 %v1128, %v1123
    %v1684 = vpack.c.b16 %v1129, %v1124
    %v1685 = vpack.c.b16 %v1130, %v1125
    %v1686 = vpack.c.b16 %v1131, %v1126
    %v1687 = vpack.c.b16 %v1137, %v1132
    %v1688 = vpack.c.b16 %v1138, %v1133
    %v1689 = vpack.c.b16 %v1139, %v1134
    %v1690 = vpack.c.b16 %v1140, %v1135
    %v1691 = vpack.c.b16 %v1141, %v1136
    %v1692 = vpack.c.b16 %v1147, %v1142
    %v1693 = vpack.c.b16 %v1148, %v1143
    %v1694 = vpack.c.b16 %v1149, %v1144
    %v1695 = vpack.c.b16 %v1150, %v1145
    %v1696 = vpack.c.b16 %v1151, %v1146
    %v1697 = vpack.c.b16 %v1157, %v1152
    %v1698 = vpack.c.b16 %v1158, %v1153
    %v1699 = vpack.c.b16 %v1159, %v1154
    %v1700 = vpack.c.b16 %v1160, %v1155
    %v1701 = vpack.c.b16 %v1161, %v1156
    %v1702 = vpack.c.b16 %v1167, %v1162
    %v1703 = vpack.c.b16 %v1168, %v1163
    %v1704 = vpack.c.b16 %v1169, %v1164
    %v1705 = vpack.c.b16 %v1170, %v1165
    %v1706 = vpack.c.b16 %v1171, %v1166
    %v1707 = vpack.c.b16 %v1177, %v1172
    %v1708 = vpack.c.b16 %v1178, %v1173
    %v1709 = vpack.c.b16 %v1179, %v1174
    %v1710 = vpack.c.b16 %v1180, %v1175
    %v1711 = vpack.c.b16 %v1181, %v1176
    %v1712 = vpack.c.b16 %v1187, %v1182
    %v1713 = vpack.c.b16 %v1188, %v1183
    %v1714 = vpack.c.b16 %v1189, %v1184
    %v1715 = vpack.c.b16 %v1190, %v1185
    %v1716 = vpack.c.b16 %v1191, %v1186
    %v1717 = vpack.c.b16 %v1197, %v1192
    %v1718 = vpack.c.b16 %v1198, %v1193
    %v1719 = vpack.c.b16 %v1199, %v1194
    %v1720 = vpack.c.b16 %v1200, %v1195
    %v1721 = vpack.c.b16 %v1201, %v1196
    %v1722 = vpack.c.b16 %v1207, %v1202
    %v1723 = vpack.c.b16 %v1208, %v1203
    %v1724 = vpack.c.b16 %v1209, %v1204
    %v1725 = vpack.c.b16 %v1210, %v1205
    %v1726 = vpack.c.b16 %v1211, %v1206
    %v1727 = vpack.c.b16 %v1217, %v1212
    %v1728 = vpack.c.b16 %v1218, %v1213
    %v1729 = vpack.c.b16 %v1219, %v1214
    %v1730 = vpack.c.b16 %v1220, %v1215
    %v1731 = vpack.c.b16 %v1221, %v1216
    %v1732 = vpack.c.b16 %v1227, %v1222
    %v1733 = vpack.c.b16 %v1228, %v1223
    %v1734 = vpack.c.b16 %v1229, %v1224
    %v1735 = vpack.c.b16 %v1230, %v1225
    %v1736 = vpack.c.b16 %v1231, %v1226
    %v1737 = vpack.c.b16 %v1237, %v1232
    %v1738 = vpack.c.b16 %v1238, %v1233
    %v1739 = vpack.c.b16 %v1239, %v1234
    %v1740 = vpack.c.b16 %v1240, %v1235
    %v1741 = vpack.c.b16 %v1241, %v1236
    %v1742 = vpack.c.b16 %v1247, %v1242
    %v1743 = vpack.c.b16 %v1248, %v1243
    %v1744 = vpack.c.b16 %v1249, %v1244
    %v1745 = vpack.c.b16 %v1250, %v1245
    %v1746 = vpack.c.b16 %v1251, %v1246
    %v1747 = vpack.c.b16 %v1257, %v1252
    %v1748 = vpack.c.b16 %v1258, %v1253
    %v1749 = vpack.c.b16 %v1259, %v1254
    %v1750 = vpack.c.b16 %v1260, %v1255
    %v1751 = vpack.c.b16 %v1261, %v1256
    %v1752 = vpack.c.b16 %v1267, %v1262
    %v1753 = vpack.c.b16 %v1268, %v1263
    %v1754 = vpack.c.b16 %v1269, %v1264
    %v1755 = vpack.c.b16 %v1270, %v1265
    %v1756 = vpack.c.b16 %v1271, %v1266
    %v1757 = vpack.c.b16 %v1277, %v1272
    %v1758 = vpack.c.b16 %v1278, %v1273
    %v1759 = vpack.c.b16 %v1279, %v1274
    %v1760 = vpack.c.b16 %v1280, %v1275
    %v1761 = vpack.c.b16 %v1281, %v1276
    %v1762 = vpack.c.b16 %v1287, %v1282
    %v1763 = vpack.c.b16 %v1288, %v1283
    %v1764 = vpack.c.b16 %v1289, %v1284
    %v1765 = vpack.c.b16 %v1290, %v1285
    %v1766 = vpack.c.b16 %v1291, %v1286
    %v1767 = vpack.c.b16 %v1297, %v1292
    %v1768 = vpack.c.b16 %v1298, %v1293
    %v1769 = vpack.c.b16 %v1299, %v1294
    %v1770 = vpack.c.b16 %v1300, %v1295
    %v1771 = vpack.c.b16 %v1301, %v1296
    %v1772 = vpack.c.b16 %v1307, %v1302
    %v1773 = vpack.c.b16 %v1308, %v1303
    %v1774 = vpack.c.b16 %v1309, %v1304
    %v1775 = vpack.c.b16 %v1310, %v1305
    %v1776 = vpack.c.b16 %v1311, %v1306
    %v1777 = vpack.c.b16 %v1317, %v1312
    %v1778 = vpack.c.b16 %v1318, %v1313
    %v1779 = vpack.c.b16 %v1319, %v1314
    %v1780 = vpack.c.b16 %v1320, %v1315
    %v1781 = vpack.c.b16 %v1321, %v1316
    %v1782 = vpack.c.b16 %v1327, %v1322
    %v1783 = vpack.c.b16 %v1328, %v1323
    %v1784 = vpack.c.b16 %v1329, %v1324
    %v1785 = vpack.c.b16 %v1330, %v1325
    %v1786 = vpack.c.b16 %v1331, %v1326
    %v1787 = vpack.c.b16 %v1337, %v1332
    %v1788 = vpack.c.b16 %v1338, %v1333
    %v1789 = vpack.c.b16 %v1339, %v1334
    %v1790 = vpack.c.b16 %v1340, %v1335
    %v1791 = vpack.c.b16 %v1341, %v1336
    %v1792 = vpack.c.b16 %v1347, %v1342
    %v1793 = vpack.c.b16 %v1348, %v1343
    %v1794 = vpack.c.b16 %v1349, %v1344
    %v1795 = vpack.c.b16 %v1350, %v1345
    %v1796 = vpack.c.b16 %v1351, %v1346
    %v1797 = vpack.c.b16 %v1357, %v1352
    %v1798 = vpack.c.b16 %v1358, %v1353
    %v1799 = vpack.c.b16 %v1359, %v1354
    %v1800 = vpack.c.b16 %v1360, %v1355
    %v1801 = vpack.c.b16 %v1361, %v1356
    %v1802 = vpack.c.b16 %v1367, %v1362
    %v1803 = vpack.c.b16 %v1368, %v1363
    %v1804 = vpack.c.b16 %v1369, %v1364
    %v1805 = vpack.c.b16 %v1370, %v1365
    %v1806 = vpack.c.b16 %v1371, %v1366
    %v1807 = vpack.c.b16 %v1377, %v1372
    %v1808 = vpack.c.b16 %v1378, %v1373
    %v1809 = vpack.c.b16 %v1379, %v1374
    %v1810 = vpack.c.b16 %v1380, %v1375
    %v1811 = vpack.c.b16 %v1381, %v1376
    %v1812 = vpack.c.b16 %v1387, %v1382
    %v1813 = vpack.c.b16 %v1388, %v1383
    %v1814 = vpack.c.b16 %v1389, %v1384
    %v1815 = vpack.c.b16 %v1390, %v1385
    %v1816 = vpack.c.b16 %v1391, %v1386
    %v1817 = vpack.c.b16 %v1397, %v1392
    %v1818 = vpack.c.b16 %v1398, %v1393
    %v1819 = vpack.c.b16 %v1399, %v1394
    %v1820 = vpack.c.b16 %v1400, %v1395
    %v1821 = vpack.c.b16 %v1401, %v1396
    %v1822 = vpack.c.b16 %v1407, %v1402
    %v1823 = vpack.c.b16 %v1408, %v1403
    %v1824 = vpack.c.b16 %v1409, %v1404
    %v1825 = vpack.c.b16 %v1410, %v1405
    %v1826 = vpack.c.b16 %v1411, %v1406
    %v1827 = vpack.c.b16 %v1417, %v1412
    %v1828 = vpack.c.b16 %v1418, %v1413
    %v1829 = vpack.c.b16 %v1419, %v1414
    %v1830 = vpack.c.b16 %v1420, %v1415
    %v1831 = vpack.c.b16 %v1421, %v1416
    %v1832 = vpack.c.b16 %v1427, %v1422
    %v1833 = vpack.c.b16 %v1428, %v1423
    %v1834 = vpack.c.b16 %v1429, %v1424
    %v1835 = vpack.c.b16 %v1430, %v1425
    %v1836 = vpack.c.b16 %v1431, %v1426
    %v1837 = vpack.c.b16 %v1437, %v1432
    %v1838 = vpack.c.b16 %v1438, %v1433
    %v1839 = vpack.c.b16 %v1439, %v1434
    %v1840 = vpack.c.b16 %v1440, %v1435
    %v1841 = vpack.c.b16 %v1441, %v1436
    %v1842 = vpack.c.b16 %v1447, %v1442
    %v1843 = vpack.c.b16 %v1448, %v1443
    %v1844 = vpack.c.b16 %v1449, %v1444
    %v1845 = vpack.c.b16 %v1450, %v1445
    %v1846 = vpack.c.b16 %v1451, %v1446
    %v1847 = vpack.c.b16 %v1457, %v1452
    %v1848 = vpack.c.b16 %v1458, %v1453
    %v1849 = vpack.c.b16 %v1459, %v1454
    %v1850 = vpack.c.b16 %v1460, %v1455
    %v1851 = vpack.c.b16 %v1461, %v1456
    %v1852 = vpack.c.b16 %v1467, %v1462
    %v1853 = vpack.c.b16 %v1468, %v1463
    %v1854 = vpack.c.b16 %v1469, %v1464
    %v1855 = vpack.c.b16 %v1470, %v1465
    %v1856 = vpack.c.b16 %v1471, %v1466
    %v1857 = vpack.c.b16 %v1477, %v1472
    %v1858 = vpack.c.b16 %v1478, %v1473
    %v1859 = vpack.c.b16 %v1479, %v1474
    %v1860 = vpack.c.b16 %v1480, %v1475
    %v1861 = vpack.c.b16 %v1481, %v1476
    %v1862 = vpack.c.b16 %v1487, %v1482
    %v1863 = vpack.c.b16 %v1488, %v1483
    %v1864 = vpack.c.b16 %v1489, %v1484
    %v1865 = vpack.c.b16 %v1490, %v1485
    %v1866 = vpack.c.b16 %v1491, %v1486
    %v1867 = vpack.c.b16 %v1497, %v1492
    %v1868 = vpack.c.b16 %v1498, %v1493
    %v1869 = vpack.c.b16 %v1499, %v1494
    %v1870 = vpack.c.b16 %v1500, %v1495
    %v1871 = vpack.c.b16 %v1501, %v1496
    %v1872 = vpack.c.b16 %v1507, %v1502
    %v1873 = vpack.c.b16 %v1508, %v1503
    %v1874 = vpack.c.b16 %v1509, %v1504
    %v1875 = vpack.c.b16 %v1510, %v1505
    %v1876 = vpack.c.b16 %v1511, %v1506
    %v1877 = vpack.c.b16 %v1517, %v1512
    %v1878 = vpack.c.b16 %v1518, %v1513
    %v1879 = vpack.c.b16 %v1519, %v1514
    %v1880 = vpack.c.b16 %v1520, %v1515
    %v1881 = vpack.c.b16 %v1521, %v1516
    %v1882 = vpack.c.b16 %v1527, %v1522
    %v1883 = vpack.c.b16 %v1528, %v1523
    %v1884 = vpack.c.b16 %v1529, %v1524
    %v1885 = vpack.c.b16 %v1530, %v1525
    %v1886 = vpack.c.b16 %v1531, %v1526
    %v1887 = vpack.c.b16 %v1537, %v1532
    %v1888 = vpack.c.b16 %v1538, %v1533
    %v1889 = vpack.c.b16 %v1539, %v1534
    %v1890 = vpack.c.b16 %v1540, %v1535
    %v1891 = vpack.c.b16 %v1541, %v1536
    %v1892 = vpack.c.b16 %v1547, %v1542
    %v1893 = vpack.c.b16 %v1548, %v1543
    %v1894 = vpack.c.b16 %v1549, %v1544
    %v1895 = vpack.c.b16 %v1550, %v1545
    %v1896 = vpack.c.b16 %v1551, %v1546
    %v1897 = vpack.c.b16 %v1557, %v1552
    %v1898 = vpack.c.b16 %v1558, %v1553
    %v1899 = vpack.c.b16 %v1559, %v1554
    %v1900 = vpack.c.b16 %v1560, %v1555
    %v1901 = vpack.c.b16 %v1561, %v1556
    %v1902 = vpack.c.b16 %v1567, %v1562
    %v1903 = vpack.c.b16 %v1568, %v1563
    %v1904 = vpack.c.b16 %v1569, %v1564
    %v1905 = vpack.c.b16 %v1570, %v1565
    %v1906 = vpack.c.b16 %v1571, %v1566
    %v1907 = vpack.c.b16 %v1577, %v1572
    %v1908 = vpack.c.b16 %v1578, %v1573
    %v1909 = vpack.c.b16 %v1579, %v1574
    %v1910 = vpack.c.b16 %v1580, %v1575
    %v1911 = vpack.c.b16 %v1581, %v1576
    %v1912 = vpack.c.b16 %v1587, %v1582
    %v1913 = vpack.c.b16 %v1588, %v1583
    %v1914 = vpack.c.b16 %v1589, %v1584
    %v1915 = vpack.c.b16 %v1590, %v1585
    %v1916 = vpack.c.b16 %v1591, %v1586
    %v1917 = vpack.c.b16 %v1597, %v1592
    %v1918 = vpack.c.b16 %v1598, %v1593
    %v1919 = vpack.c.b16 %v1599, %v1594
    %v1920 = vpack.c.b16 %v1600, %v1595
    %v1921 = vpack.c.b16 %v1601, %v1596
    %v1922 = vpack.c.b16 %v1607, %v1602
    %v1923 = vpack.c.b16 %v1608, %v1603
    %v1924 = vpack.c.b16 %v1609, %v1604
    %v1925 = vpack.c.b16 %v1610, %v1605
    %v1926 = vpack.c.b16 %v1611, %v1606
    %v1927 = vpack.c.b16 %v1617, %v1612
    %v1928 = vpack.c.b16 %v1618, %v1613
    %v1929 = vpack.c.b16 %v1619, %v1614
    %v1930 = vpack.c.b16 %v1620, %v1615
    %v1931 = vpack.c.b16 %v1621, %v1616
    %v1932 = vpack.c.b16 %v1627, %v1622
    %v1933 = vpack.c.b16 %v1628, %v1623
    %v1934 = vpack.c.b16 %v1629, %v1624
    %v1935 = vpack.c.b16 %v1630, %v1625
    %v1936 = vpack.c.b16 %v1631, %v1626
    %v1937 = vpack.c.b16 %v1637, %v1632
    %v1938 = vpack.c.b16 %v1638, %v1633
    %v1939 = vpack.c.b16 %v1639, %v1634
    %v1940 = vpack.c.b16 %v1640, %v1635
    %v1941 = vpack.c.b16 %v1641, %v1636
    %v1942 = vpack.c.b16 %v1647, %v1642
    %v1943 = vpack.c.b16 %v1648, %v1643
    %v1944 = vpack.c.b16 %v1649, %v1644
    %v1945 = vpack.c.b16 %v1650, %v1645
    %v1946 = vpack.c.b16 %v1651, %v1646
    %v1947 = vpack.c.b16 %v1657, %v1652
    %v1948 = vpack.c.b16 %v1658, %v1653
    %v1949 = vpack.c.b16 %v1659, %v1654
    %v1950 = vpack.c.b16 %v1660, %v1655
    %v1951 = vpack.c.b16 %v1661, %v1656
    %v1952 = vpack.c.b16 %v1667, %v1662
    %v1953 = vpack.c.b16 %v1668, %v1663
    %v1954 = vpack.c.b16 %v1669, %v1664
    %v1955 = vpack.c.b16 %v1670, %v1665
    %v1956 = vpack.c.b16 %v1671, %v1666
    %v1957 = vpack.c.b16 %v1677, %v1672
    %v1958 = vpack.c.b16 %v1678, %v1673
    %v1959 = vpack.c.b16 %v1679, %v1674
    %v1960 = vpack.c.b16 %v1680, %v1675
    %v1961 = vpack.c.b16 %v1681, %v1676
    %2242 = vmatprep.subr.bf16.mxu0 %v1718
    %2243 = vmatpush1.bf16.msra.mxu0 %v1717
    %2244 = vmatprep.subr.bf16.mxu0 %v1713
    %2245 = vmatpush1.bf16.msra.mxu0 %v1712
    %2246 = vmatprep.subr.bf16.mxu0 %v1708
    %2247 = vmatpush1.bf16.msra.mxu0 %v1707
    %2248 = vmatprep.subr.bf16.mxu0 %v1703
    %2249 = vmatpush1.bf16.msra.mxu0 %v1702
    %2250 = vmatprep.subr.bf16.mxu0 %v1698
    %2251 = vmatpush1.bf16.msra.mxu0 %v1697
    %2252 = vmatprep.subr.bf16.mxu0 %v1693
    %2253 = vmatpush1.bf16.msra.mxu0 %v1692
    %2254 = vmatprep.subr.bf16.mxu0 %v1688
    %2255 = vmatpush1.bf16.msra.mxu0 %v1687
    %2256 = vmatprep.subr.bf16.mxu0 %v1683
    %2257 = vmatpush1.bf16.msra.mxu0 %v1682
    %2258 = vmatprep.subr.bf16.mxu0 %v1758
    %2259 = vmatpush2.bf16.msra.mxu0 %v1757
    %2260 = vmatprep.subr.bf16.mxu0 %v1753
    %2261 = vmatpush2.bf16.msra.mxu0 %v1752
    %2262 = vmatprep.subr.bf16.mxu0 %v1748
    %2263 = vmatpush2.bf16.msra.mxu0 %v1747
    %2264 = vmatprep.subr.bf16.mxu0 %v1743
    %2265 = vmatpush2.bf16.msra.mxu0 %v1742
    %2266 = vmatprep.subr.bf16.mxu0 %v1738
    %2267 = vmatpush2.bf16.msra.mxu0 %v1737
    %2268 = vmatprep.subr.bf16.mxu0 %v1733
    %2269 = vmatpush2.bf16.msra.mxu0 %v1732
    %2270 = vmatprep.subr.bf16.mxu0 %v1728
    %2271 = vmatpush2.bf16.msra.mxu0 %v1727
    %2272 = vmatprep.subr.bf16.mxu0 %v1723
    %2273 = vmatpush2.bf16.msra.mxu0 %v1722
    %2274 = vmatprep.mubr.bf16.mxu0 %v417
    %2275 = vmatmul.mubr.bf16.gmra.mxu0 %v416
    %v2276 = vpop.f32.mrf.mxu0
    %v2277 = vadd.f32 %v764, %v2276
    %v2278 = vpop.f32.mrf.mxu0
    %v2279 = vadd.f32 %v768, %v2278
    %v2280 = vpop.f32.mrf.mxu0
    %v2281 = vpop.f32.mrf.mxu0
    %2282 = vdwg.mxu0
    %2283 = vmatprep.subr.bf16.mxu0 %v1798
    %2284 = vmatpush1.bf16.msra.mxu0 %v1797
    %2285 = vmatprep.subr.bf16.mxu0 %v1793
    %2286 = vmatpush1.bf16.msra.mxu0 %v1792
    %2287 = vmatprep.subr.bf16.mxu0 %v1788
    %2288 = vmatpush1.bf16.msra.mxu0 %v1787
    %2289 = vmatprep.subr.bf16.mxu0 %v1783
    %2290 = vmatpush1.bf16.msra.mxu0 %v1782
    %2291 = vmatprep.subr.bf16.mxu0 %v1778
    %2292 = vmatpush1.bf16.msra.mxu0 %v1777
    %2293 = vmatprep.subr.bf16.mxu0 %v1773
    %2294 = vmatpush1.bf16.msra.mxu0 %v1772
    %2295 = vmatprep.subr.bf16.mxu0 %v1768
    %2296 = vmatpush1.bf16.msra.mxu0 %v1767
    %2297 = vmatprep.subr.bf16.mxu0 %v1763
    %2298 = vmatpush1.bf16.msra.mxu0 %v1762
    %2299 = vmatprep.subr.bf16.mxu0 %v1838
    %2300 = vmatpush2.bf16.msra.mxu0 %v1837
    %2301 = vmatprep.subr.bf16.mxu0 %v1833
    %2302 = vmatpush2.bf16.msra.mxu0 %v1832
    %2303 = vmatprep.subr.bf16.mxu0 %v1828
    %2304 = vmatpush2.bf16.msra.mxu0 %v1827
    %2305 = vmatprep.subr.bf16.mxu0 %v1823
    %2306 = vmatpush2.bf16.msra.mxu0 %v1822
    %2307 = vmatprep.subr.bf16.mxu0 %v1818
    %2308 = vmatpush2.bf16.msra.mxu0 %v1817
    %2309 = vmatprep.subr.bf16.mxu0 %v1813
    %2310 = vmatpush2.bf16.msra.mxu0 %v1812
    %2311 = vmatprep.subr.bf16.mxu0 %v1808
    %2312 = vmatpush2.bf16.msra.mxu0 %v1807
    %2313 = vmatprep.subr.bf16.mxu0 %v1803
    %2314 = vmatpush2.bf16.msra.mxu0 %v1802
    %2315 = vmatprep.mubr.bf16.mxu0 %v419
    %2316 = vmatmul.mubr.bf16.gmra.mxu0 %v418
    %v2317 = vpop.f32.mrf.mxu0
    %v2318 = vadd.f32 %v2277, %v2317
    %v2319 = vpop.f32.mrf.mxu0
    %v2320 = vadd.f32 %v2279, %v2319
    %v2321 = vpop.f32.mrf.mxu0
    %v2322 = vpop.f32.mrf.mxu0
    %2323 = vdwg.mxu0
    %2324 = vmatprep.subr.bf16.mxu0 %v1878
    %2325 = vmatpush1.bf16.msra.mxu0 %v1877
    %2326 = vmatprep.subr.bf16.mxu0 %v1873
    %2327 = vmatpush1.bf16.msra.mxu0 %v1872
    %2328 = vmatprep.subr.bf16.mxu0 %v1868
    %2329 = vmatpush1.bf16.msra.mxu0 %v1867
    %2330 = vmatprep.subr.bf16.mxu0 %v1863
    %2331 = vmatpush1.bf16.msra.mxu0 %v1862
    %2332 = vmatprep.subr.bf16.mxu0 %v1858
    %2333 = vmatpush1.bf16.msra.mxu0 %v1857
    %2334 = vmatprep.subr.bf16.mxu0 %v1853
    %2335 = vmatpush1.bf16.msra.mxu0 %v1852
    %2336 = vmatprep.subr.bf16.mxu0 %v1848
    %2337 = vmatpush1.bf16.msra.mxu0 %v1847
    %2338 = vmatprep.subr.bf16.mxu0 %v1843
    %2339 = vmatpush1.bf16.msra.mxu0 %v1842
    %2340 = vmatprep.subr.bf16.mxu0 %v1918
    %2341 = vmatpush2.bf16.msra.mxu0 %v1917
    %2342 = vmatprep.subr.bf16.mxu0 %v1913
    %2343 = vmatpush2.bf16.msra.mxu0 %v1912
    %2344 = vmatprep.subr.bf16.mxu0 %v1908
    %2345 = vmatpush2.bf16.msra.mxu0 %v1907
    %2346 = vmatprep.subr.bf16.mxu0 %v1903
    %2347 = vmatpush2.bf16.msra.mxu0 %v1902
    %2348 = vmatprep.subr.bf16.mxu0 %v1898
    %2349 = vmatpush2.bf16.msra.mxu0 %v1897
    %2350 = vmatprep.subr.bf16.mxu0 %v1893
    %2351 = vmatpush2.bf16.msra.mxu0 %v1892
    %2352 = vmatprep.subr.bf16.mxu0 %v1888
    %2353 = vmatpush2.bf16.msra.mxu0 %v1887
    %2354 = vmatprep.subr.bf16.mxu0 %v1883
    %2355 = vmatpush2.bf16.msra.mxu0 %v1882
    %2356 = vmatprep.mubr.bf16.mxu0 %v421
    %2357 = vmatmul.mubr.bf16.gmra.mxu0 %v420
    %v2358 = vpop.f32.mrf.mxu0
    %v2359 = vadd.f32 %v2318, %v2358
    %v2360 = vpop.f32.mrf.mxu0
    %v2361 = vadd.f32 %v2320, %v2360
    %v2362 = vpop.f32.mrf.mxu0
    %v2363 = vpop.f32.mrf.mxu0
    %2364 = vdwg.mxu0
    %2365 = vmatprep.subr.bf16.mxu0 %v1958
    %2366 = vmatpush1.bf16.msra.mxu0 %v1957
    %2367 = vmatprep.subr.bf16.mxu0 %v1953
    %2368 = vmatpush1.bf16.msra.mxu0 %v1952
    %2369 = vmatprep.subr.bf16.mxu0 %v1948
    %2370 = vmatpush1.bf16.msra.mxu0 %v1947
    %2371 = vmatprep.subr.bf16.mxu0 %v1943
    %2372 = vmatpush1.bf16.msra.mxu0 %v1942
    %2373 = vmatprep.subr.bf16.mxu0 %v1938
    %2374 = vmatpush1.bf16.msra.mxu0 %v1937
    %2375 = vmatprep.subr.bf16.mxu0 %v1933
    %2376 = vmatpush1.bf16.msra.mxu0 %v1932
    %2377 = vmatprep.subr.bf16.mxu0 %v1928
    %2378 = vmatpush1.bf16.msra.mxu0 %v1927
    %2379 = vmatprep.subr.bf16.mxu0 %v1923
    %2380 = vmatpush1.bf16.msra.mxu0 %v1922
    %2381 = vmatprep.subr.bf16.mxu0 0
    %2382 = vmatpush2.bf16.msra.mxu0 0
    %2383 = vmatprep.subr.bf16.mxu0 0
    %2384 = vmatpush2.bf16.msra.mxu0 0
    %2385 = vmatprep.subr.bf16.mxu0 0
    %2386 = vmatpush2.bf16.msra.mxu0 0
    %2387 = vmatprep.subr.bf16.mxu0 0
    %2388 = vmatpush2.bf16.msra.mxu0 0
    %2389 = vmatprep.subr.bf16.mxu0 0
    %2390 = vmatpush2.bf16.msra.mxu0 0
    %2391 = vmatprep.subr.bf16.mxu0 0
    %2392 = vmatpush2.bf16.msra.mxu0 0
    %2393 = vmatprep.subr.bf16.mxu0 0
    %2394 = vmatpush2.bf16.msra.mxu0 0
    %2395 = vmatprep.subr.bf16.mxu0 0
    %2396 = vmatpush2.bf16.msra.mxu0 0
    %2397 = vmatprep.mubr.bf16.mxu0 0
    %2398 = vmatmul.mubr.bf16.gmra.mxu0 %v422
    %v2399 = vpop.f32.mrf.mxu0
    %v2400 = vadd.f32 %v2359, %v2399
    %v2401 = vpop.f32.mrf.mxu0
    %v2402 = vadd.f32 %v2361, %v2401
    %v2403 = vpop.f32.mrf.mxu0
    %v2404 = vpop.f32.mrf.mxu0
    %2405 = vdwg.mxu0
    %2406 = vmatprep.subr.bf16.mxu0 %v1720
    %2407 = vmatpush1.bf16.msra.mxu0 %v1719
    %2408 = vmatprep.subr.bf16.mxu0 %v1715
    %2409 = vmatpush1.bf16.msra.mxu0 %v1714
    %2410 = vmatprep.subr.bf16.mxu0 %v1710
    %2411 = vmatpush1.bf16.msra.mxu0 %v1709
    %2412 = vmatprep.subr.bf16.mxu0 %v1705
    %2413 = vmatpush1.bf16.msra.mxu0 %v1704
    %2414 = vmatprep.subr.bf16.mxu0 %v1700
    %2415 = vmatpush1.bf16.msra.mxu0 %v1699
    %2416 = vmatprep.subr.bf16.mxu0 %v1695
    %2417 = vmatpush1.bf16.msra.mxu0 %v1694
    %2418 = vmatprep.subr.bf16.mxu0 %v1690
    %2419 = vmatpush1.bf16.msra.mxu0 %v1689
    %2420 = vmatprep.subr.bf16.mxu0 %v1685
    %2421 = vmatpush1.bf16.msra.mxu0 %v1684
    %2422 = vmatprep.subr.bf16.mxu0 %v1760
    %2423 = vmatpush2.bf16.msra.mxu0 %v1759
    %2424 = vmatprep.subr.bf16.mxu0 %v1755
    %2425 = vmatpush2.bf16.msra.mxu0 %v1754
    %2426 = vmatprep.subr.bf16.mxu0 %v1750
    %2427 = vmatpush2.bf16.msra.mxu0 %v1749
    %2428 = vmatprep.subr.bf16.mxu0 %v1745
    %2429 = vmatpush2.bf16.msra.mxu0 %v1744
    %2430 = vmatprep.subr.bf16.mxu0 %v1740
    %2431 = vmatpush2.bf16.msra.mxu0 %v1739
    %2432 = vmatprep.subr.bf16.mxu0 %v1735
    %2433 = vmatpush2.bf16.msra.mxu0 %v1734
    %2434 = vmatprep.subr.bf16.mxu0 %v1730
    %2435 = vmatpush2.bf16.msra.mxu0 %v1729
    %2436 = vmatprep.subr.bf16.mxu0 %v1725
    %2437 = vmatpush2.bf16.msra.mxu0 %v1724
    %2438 = vmatprep.mubr.bf16.mxu0 %v417
    %2439 = vmatmul.mubr.bf16.gmra.mxu0 %v416
    %v2440 = vpop.f32.mrf.mxu0
    %v2441 = vadd.f32 %v772, %v2440
    %v2442 = vpop.f32.mrf.mxu0
    %v2443 = vadd.f32 %v776, %v2442
    %v2444 = vpop.f32.mrf.mxu0
    %v2445 = vpop.f32.mrf.mxu0
    %2446 = vdwg.mxu0
    %2447 = vmatprep.subr.bf16.mxu0 %v1800
    %2448 = vmatpush1.bf16.msra.mxu0 %v1799
    %2449 = vmatprep.subr.bf16.mxu0 %v1795
    %2450 = vmatpush1.bf16.msra.mxu0 %v1794
    %2451 = vmatprep.subr.bf16.mxu0 %v1790
    %2452 = vmatpush1.bf16.msra.mxu0 %v1789
    %2453 = vmatprep.subr.bf16.mxu0 %v1785
    %2454 = vmatpush1.bf16.msra.mxu0 %v1784
    %2455 = vmatprep.subr.bf16.mxu0 %v1780
    %2456 = vmatpush1.bf16.msra.mxu0 %v1779
    %2457 = vmatprep.subr.bf16.mxu0 %v1775
    %2458 = vmatpush1.bf16.msra.mxu0 %v1774
    %2459 = vmatprep.subr.bf16.mxu0 %v1770
    %2460 = vmatpush1.bf16.msra.mxu0 %v1769
    %2461 = vmatprep.subr.bf16.mxu0 %v1765
    %2462 = vmatpush1.bf16.msra.mxu0 %v1764
    %2463 = vmatprep.subr.bf16.mxu0 %v1840
    %2464 = vmatpush2.bf16.msra.mxu0 %v1839
    %2465 = vmatprep.subr.bf16.mxu0 %v1835
    %2466 = vmatpush2.bf16.msra.mxu0 %v1834
    %2467 = vmatprep.subr.bf16.mxu0 %v1830
    %2468 = vmatpush2.bf16.msra.mxu0 %v1829
    %2469 = vmatprep.subr.bf16.mxu0 %v1825
    %2470 = vmatpush2.bf16.msra.mxu0 %v1824
    %2471 = vmatprep.subr.bf16.mxu0 %v1820
    %2472 = vmatpush2.bf16.msra.mxu0 %v1819
    %2473 = vmatprep.subr.bf16.mxu0 %v1815
    %2474 = vmatpush2.bf16.msra.mxu0 %v1814
    %2475 = vmatprep.subr.bf16.mxu0 %v1810
    %2476 = vmatpush2.bf16.msra.mxu0 %v1809
    %2477 = vmatprep.subr.bf16.mxu0 %v1805
    %2478 = vmatpush2.bf16.msra.mxu0 %v1804
    %2479 = vmatprep.mubr.bf16.mxu0 %v419
    %2480 = vmatmul.mubr.bf16.gmra.mxu0 %v418
    %v2481 = vpop.f32.mrf.mxu0
    %v2482 = vadd.f32 %v2441, %v2481
    %v2483 = vpop.f32.mrf.mxu0
    %v2484 = vadd.f32 %v2443, %v2483
    %v2485 = vpop.f32.mrf.mxu0
    %v2486 = vpop.f32.mrf.mxu0
    %2487 = vdwg.mxu0
    %2488 = vmatprep.subr.bf16.mxu0 %v1880
    %2489 = vmatpush1.bf16.msra.mxu0 %v1879
    %2490 = vmatprep.subr.bf16.mxu0 %v1875
    %2491 = vmatpush1.bf16.msra.mxu0 %v1874
    %2492 = vmatprep.subr.bf16.mxu0 %v1870
    %2493 = vmatpush1.bf16.msra.mxu0 %v1869
    %2494 = vmatprep.subr.bf16.mxu0 %v1865
    %2495 = vmatpush1.bf16.msra.mxu0 %v1864
    %2496 = vmatprep.subr.bf16.mxu0 %v1860
    %2497 = vmatpush1.bf16.msra.mxu0 %v1859
    %2498 = vmatprep.subr.bf16.mxu0 %v1855
    %2499 = vmatpush1.bf16.msra.mxu0 %v1854
    %2500 = vmatprep.subr.bf16.mxu0 %v1850
    %2501 = vmatpush1.bf16.msra.mxu0 %v1849
    %2502 = vmatprep.subr.bf16.mxu0 %v1845
    %2503 = vmatpush1.bf16.msra.mxu0 %v1844
    %2504 = vmatprep.subr.bf16.mxu0 %v1920
    %2505 = vmatpush2.bf16.msra.mxu0 %v1919
    %2506 = vmatprep.subr.bf16.mxu0 %v1915
    %2507 = vmatpush2.bf16.msra.mxu0 %v1914
    %2508 = vmatprep.subr.bf16.mxu0 %v1910
    %2509 = vmatpush2.bf16.msra.mxu0 %v1909
    %2510 = vmatprep.subr.bf16.mxu0 %v1905
    %2511 = vmatpush2.bf16.msra.mxu0 %v1904
    %2512 = vmatprep.subr.bf16.mxu0 %v1900
    %2513 = vmatpush2.bf16.msra.mxu0 %v1899
    %2514 = vmatprep.subr.bf16.mxu0 %v1895
    %2515 = vmatpush2.bf16.msra.mxu0 %v1894
    %2516 = vmatprep.subr.bf16.mxu0 %v1890
    %2517 = vmatpush2.bf16.msra.mxu0 %v1889
    %2518 = vmatprep.subr.bf16.mxu0 %v1885
    %2519 = vmatpush2.bf16.msra.mxu0 %v1884
    %2520 = vmatprep.mubr.bf16.mxu0 %v421
    %2521 = vmatmul.mubr.bf16.gmra.mxu0 %v420
    %v2522 = vpop.f32.mrf.mxu0
    %v2523 = vadd.f32 %v2482, %v2522
    %v2524 = vpop.f32.mrf.mxu0
    %v2525 = vadd.f32 %v2484, %v2524
    %v2526 = vpop.f32.mrf.mxu0
    %v2527 = vpop.f32.mrf.mxu0
    %2528 = vdwg.mxu0
    %2529 = vmatprep.subr.bf16.mxu0 %v1960
    %2530 = vmatpush1.bf16.msra.mxu0 %v1959
    %2531 = vmatprep.subr.bf16.mxu0 %v1955
    %2532 = vmatpush1.bf16.msra.mxu0 %v1954
    %2533 = vmatprep.subr.bf16.mxu0 %v1950
    %2534 = vmatpush1.bf16.msra.mxu0 %v1949
    %2535 = vmatprep.subr.bf16.mxu0 %v1945
    %2536 = vmatpush1.bf16.msra.mxu0 %v1944
    %2537 = vmatprep.subr.bf16.mxu0 %v1940
    %2538 = vmatpush1.bf16.msra.mxu0 %v1939
    %2539 = vmatprep.subr.bf16.mxu0 %v1935
    %2540 = vmatpush1.bf16.msra.mxu0 %v1934
    %2541 = vmatprep.subr.bf16.mxu0 %v1930
    %2542 = vmatpush1.bf16.msra.mxu0 %v1929
    %2543 = vmatprep.subr.bf16.mxu0 %v1925
    %2544 = vmatpush1.bf16.msra.mxu0 %v1924
    %2545 = vmatprep.subr.bf16.mxu0 0
    %2546 = vmatpush2.bf16.msra.mxu0 0
    %2547 = vmatprep.subr.bf16.mxu0 0
    %2548 = vmatpush2.bf16.msra.mxu0 0
    %2549 = vmatprep.subr.bf16.mxu0 0
    %2550 = vmatpush2.bf16.msra.mxu0 0
    %2551 = vmatprep.subr.bf16.mxu0 0
    %2552 = vmatpush2.bf16.msra.mxu0 0
    %2553 = vmatprep.subr.bf16.mxu0 0
    %2554 = vmatpush2.bf16.msra.mxu0 0
    %2555 = vmatprep.subr.bf16.mxu0 0
    %2556 = vmatpush2.bf16.msra.mxu0 0
    %2557 = vmatprep.subr.bf16.mxu0 0
    %2558 = vmatpush2.bf16.msra.mxu0 0
    %2559 = vmatprep.subr.bf16.mxu0 0
    %2560 = vmatpush2.bf16.msra.mxu0 0
    %2561 = vmatprep.mubr.bf16.mxu0 0
    %2562 = vmatmul.mubr.bf16.gmra.mxu0 %v422
    %v2563 = vpop.f32.mrf.mxu0
    %v2564 = vadd.f32 %v2523, %v2563
    %v2565 = vpop.f32.mrf.mxu0
    %v2566 = vadd.f32 %v2525, %v2565
    %v2567 = vpop.f32.mrf.mxu0
    %v2568 = vpop.f32.mrf.mxu0
    %2569 = vdwg.mxu0
    %2570 = vmatprep.subr.bf16.mxu0 0
    %2571 = vmatpush1.bf16.msra.mxu0 %v1721
    %2572 = vmatprep.subr.bf16.mxu0 0
    %2573 = vmatpush1.bf16.msra.mxu0 %v1716
    %2574 = vmatprep.subr.bf16.mxu0 0
    %2575 = vmatpush1.bf16.msra.mxu0 %v1711
    %2576 = vmatprep.subr.bf16.mxu0 0
    %2577 = vmatpush1.bf16.msra.mxu0 %v1706
    %2578 = vmatprep.subr.bf16.mxu0 0
    %2579 = vmatpush1.bf16.msra.mxu0 %v1701
    %2580 = vmatprep.subr.bf16.mxu0 0
    %2581 = vmatpush1.bf16.msra.mxu0 %v1696
    %2582 = vmatprep.subr.bf16.mxu0 0
    %2583 = vmatpush1.bf16.msra.mxu0 %v1691
    %2584 = vmatprep.subr.bf16.mxu0 0
    %2585 = vmatpush1.bf16.msra.mxu0 %v1686
    %2586 = vmatprep.subr.bf16.mxu0 0
    %2587 = vmatpush2.bf16.msra.mxu0 %v1761
    %2588 = vmatprep.subr.bf16.mxu0 0
    %2589 = vmatpush2.bf16.msra.mxu0 %v1756
    %2590 = vmatprep.subr.bf16.mxu0 0
    %2591 = vmatpush2.bf16.msra.mxu0 %v1751
    %2592 = vmatprep.subr.bf16.mxu0 0
    %2593 = vmatpush2.bf16.msra.mxu0 %v1746
    %2594 = vmatprep.subr.bf16.mxu0 0
    %2595 = vmatpush2.bf16.msra.mxu0 %v1741
    %2596 = vmatprep.subr.bf16.mxu0 0
    %2597 = vmatpush2.bf16.msra.mxu0 %v1736
    %2598 = vmatprep.subr.bf16.mxu0 0
    %2599 = vmatpush2.bf16.msra.mxu0 %v1731
    %2600 = vmatprep.subr.bf16.mxu0 0
    %2601 = vmatpush2.bf16.msra.mxu0 %v1726
    %2602 = vmatprep.mubr.bf16.mxu0 %v417
    %2603 = vmatmul.mubr.bf16.gmra.mxu0 %v416
    %v2604 = vpop.f32.mrf.mxu0
    %v2605 = vadd.f32 %v780, %v2604
    %v2606 = vpop.f32.mrf.mxu0
    %v2607 = vpop.f32.mrf.mxu0
    %v2608 = vpop.f32.mrf.mxu0
    %2609 = vdwg.mxu0
    %2610 = vmatprep.subr.bf16.mxu0 0
    %2611 = vmatpush1.bf16.msra.mxu0 %v1801
    %2612 = vmatprep.subr.bf16.mxu0 0
    %2613 = vmatpush1.bf16.msra.mxu0 %v1796
    %2614 = vmatprep.subr.bf16.mxu0 0
    %2615 = vmatpush1.bf16.msra.mxu0 %v1791
    %2616 = vmatprep.subr.bf16.mxu0 0
    %2617 = vmatpush1.bf16.msra.mxu0 %v1786
    %2618 = vmatprep.subr.bf16.mxu0 0
    %2619 = vmatpush1.bf16.msra.mxu0 %v1781
    %2620 = vmatprep.subr.bf16.mxu0 0
    %2621 = vmatpush1.bf16.msra.mxu0 %v1776
    %2622 = vmatprep.subr.bf16.mxu0 0
    %2623 = vmatpush1.bf16.msra.mxu0 %v1771
    %2624 = vmatprep.subr.bf16.mxu0 0
    %2625 = vmatpush1.bf16.msra.mxu0 %v1766
    %2626 = vmatprep.subr.bf16.mxu0 0
    %2627 = vmatpush2.bf16.msra.mxu0 %v1841
    %2628 = vmatprep.subr.bf16.mxu0 0
    %2629 = vmatpush2.bf16.msra.mxu0 %v1836
    %2630 = vmatprep.subr.bf16.mxu0 0
    %2631 = vmatpush2.bf16.msra.mxu0 %v1831
    %2632 = vmatprep.subr.bf16.mxu0 0
    %2633 = vmatpush2.bf16.msra.mxu0 %v1826
    %2634 = vmatprep.subr.bf16.mxu0 0
    %2635 = vmatpush2.bf16.msra.mxu0 %v1821
    %2636 = vmatprep.subr.bf16.mxu0 0
    %2637 = vmatpush2.bf16.msra.mxu0 %v1816
    %2638 = vmatprep.subr.bf16.mxu0 0
    %2639 = vmatpush2.bf16.msra.mxu0 %v1811
    %2640 = vmatprep.subr.bf16.mxu0 0
    %2641 = vmatpush2.bf16.msra.mxu0 %v1806
    %2642 = vmatprep.mubr.bf16.mxu0 %v419
    %2643 = vmatmul.mubr.bf16.gmra.mxu0 %v418
    %v2644 = vpop.f32.mrf.mxu0
    %v2645 = vadd.f32 %v2605, %v2644
    %v2646 = vpop.f32.mrf.mxu0
    %v2647 = vpop.f32.mrf.mxu0
    %v2648 = vpop.f32.mrf.mxu0
    %2649 = vdwg.mxu0
    %2650 = vmatprep.subr.bf16.mxu0 0
    %2651 = vmatpush1.bf16.msra.mxu0 %v1881
    %2652 = vmatprep.subr.bf16.mxu0 0
    %2653 = vmatpush1.bf16.msra.mxu0 %v1876
    %2654 = vmatprep.subr.bf16.mxu0 0
    %2655 = vmatpush1.bf16.msra.mxu0 %v1871
    %2656 = vmatprep.subr.bf16.mxu0 0
    %2657 = vmatpush1.bf16.msra.mxu0 %v1866
    %2658 = vmatprep.subr.bf16.mxu0 0
    %2659 = vmatpush1.bf16.msra.mxu0 %v1861
    %2660 = vmatprep.subr.bf16.mxu0 0
    %2661 = vmatpush1.bf16.msra.mxu0 %v1856
    %2662 = vmatprep.subr.bf16.mxu0 0
    %2663 = vmatpush1.bf16.msra.mxu0 %v1851
    %2664 = vmatprep.subr.bf16.mxu0 0
    %2665 = vmatpush1.bf16.msra.mxu0 %v1846
    %2666 = vmatprep.subr.bf16.mxu0 0
    %2667 = vmatpush2.bf16.msra.mxu0 %v1921
    %2668 = vmatprep.subr.bf16.mxu0 0
    %2669 = vmatpush2.bf16.msra.mxu0 %v1916
    %2670 = vmatprep.subr.bf16.mxu0 0
    %2671 = vmatpush2.bf16.msra.mxu0 %v1911
    %2672 = vmatprep.subr.bf16.mxu0 0
    %2673 = vmatpush2.bf16.msra.mxu0 %v1906
    %2674 = vmatprep.subr.bf16.mxu0 0
    %2675 = vmatpush2.bf16.msra.mxu0 %v1901
    %2676 = vmatprep.subr.bf16.mxu0 0
    %2677 = vmatpush2.bf16.msra.mxu0 %v1896
    %2678 = vmatprep.subr.bf16.mxu0 0
    %2679 = vmatpush2.bf16.msra.mxu0 %v1891
    %2680 = vmatprep.subr.bf16.mxu0 0
    %2681 = vmatpush2.bf16.msra.mxu0 %v1886
    %2682 = vmatprep.mubr.bf16.mxu0 %v421
    %2683 = vmatmul.mubr.bf16.gmra.mxu0 %v420
    %v2684 = vpop.f32.mrf.mxu0
    %v2685 = vadd.f32 %v2645, %v2684
    %v2686 = vpop.f32.mrf.mxu0
    %v2687 = vpop.f32.mrf.mxu0
    %v2688 = vpop.f32.mrf.mxu0
    %2689 = vdwg.mxu0
    %2690 = vmatprep.subr.bf16.mxu0 0
    %2691 = vmatpush1.bf16.msra.mxu0 %v1961
    %2692 = vmatprep.subr.bf16.mxu0 0
    %2693 = vmatpush1.bf16.msra.mxu0 %v1956
    %2694 = vmatprep.subr.bf16.mxu0 0
    %2695 = vmatpush1.bf16.msra.mxu0 %v1951
    %2696 = vmatprep.subr.bf16.mxu0 0
    %2697 = vmatpush1.bf16.msra.mxu0 %v1946
    %2698 = vmatprep.subr.bf16.mxu0 0
    %2699 = vmatpush1.bf16.msra.mxu0 %v1941
    %2700 = vmatprep.subr.bf16.mxu0 0
    %2701 = vmatpush1.bf16.msra.mxu0 %v1936
    %2702 = vmatprep.subr.bf16.mxu0 0
    %2703 = vmatpush1.bf16.msra.mxu0 %v1931
    %2704 = vmatprep.subr.bf16.mxu0 0
    %2705 = vmatpush1.bf16.msra.mxu0 %v1926
    %2706 = vmatprep.subr.bf16.mxu0 0
    %2707 = vmatpush2.bf16.msra.mxu0 0
    %2708 = vmatprep.subr.bf16.mxu0 0
    %2709 = vmatpush2.bf16.msra.mxu0 0
    %2710 = vmatprep.subr.bf16.mxu0 0
    %2711 = vmatpush2.bf16.msra.mxu0 0
    %2712 = vmatprep.subr.bf16.mxu0 0
    %2713 = vmatpush2.bf16.msra.mxu0 0
    %2714 = vmatprep.subr.bf16.mxu0 0
    %2715 = vmatpush2.bf16.msra.mxu0 0
    %2716 = vmatprep.subr.bf16.mxu0 0
    %2717 = vmatpush2.bf16.msra.mxu0 0
    %2718 = vmatprep.subr.bf16.mxu0 0
    %2719 = vmatpush2.bf16.msra.mxu0 0
    %2720 = vmatprep.subr.bf16.mxu0 0
    %2721 = vmatpush2.bf16.msra.mxu0 0
    %2722 = vmatprep.mubr.bf16.mxu0 0
    %2723 = vmatmul.mubr.bf16.gmra.mxu0 %v422
    %v2724 = vpop.f32.mrf.mxu0
    %v2725 = vadd.f32 %v2685, %v2724
    %v2726 = vpop.f32.mrf.mxu0
    %v2727 = vpop.f32.mrf.mxu0
    %v2728 = vpop.f32.mrf.mxu0
    %2729 = vdwg.mxu0
    %v2730 = vmax.f32 %v2400, 0.0
    %v2731 = vmax.f32 %v2402, 0.0
    %v2732 = vmax.f32 %v2564, 0.0
    %v2733 = vmax.f32 %v2566, 0.0
    %v2734 = vmax.f32 %v2725, 0.0
    %v2735 = vpack.c.bf16 %v2730, %v2730
    %v2736 = vpack.c.bf16 %v2731, %v2731
    %v2737 = vpack.c.bf16 %v2732, %v2732
    %v2738 = vpack.c.bf16 %v2733, %v2733
    %v2739 = vpack.c.bf16 %v2734, %v2734
    %v2740 = vld [vmem:[#allocation11] sm:$0xf]
    %v2741 = vld [vmem:[#allocation11 + $0x4] sm:$0xf]
    %v2742 = vld [vmem:[#allocation11 + $0x8] sm:$0xf]
    %v2743 = vld [vmem:[#allocation11 + $0xc] sm:$0xf]
    %v2744 = vld [vmem:[#allocation11 + $0x10] sm:$0xf]
    %v2745 = vld [vmem:[#allocation11 + $0x14] sm:$0xf]
    %v2746 = vld [vmem:[#allocation11 + $0x18] sm:$0xf]
    %v2747 = vld [vmem:[#allocation11 + $0x1c] sm:$0xf]
    %v2748 = vld [vmem:[#allocation11 + $0x20] sm:$0xf]
    %v2749 = vld [vmem:[#allocation11 + $0x24] sm:$0xf]
    %v2750 = vld [vmem:[#allocation11 + $0x28] sm:$0xf]
    %v2751 = vld [vmem:[#allocation11 + $0x2c] sm:$0xf]
    %v2752 = vld [vmem:[#allocation11 + $0x30] sm:$0xf]
    %v2753 = vld [vmem:[#allocation11 + $0x34] sm:$0xf]
    %v2754 = vld [vmem:[#allocation11 + $0x38] sm:$0xf]
    %v2755 = vld [vmem:[#allocation11 + $0x3c] sm:$0xf]
    %v2756 = vld [vmem:[#allocation11 + $0x40] sm:$0xf]
    %v2757 = vld [vmem:[#allocation11 + $0x44] sm:$0xf]
    %v2758 = vld [vmem:[#allocation11 + $0x48] sm:$0xf]
    %v2759 = vld [vmem:[#allocation11 + $0x4c] sm:$0xf]
    %v2760 = vld [vmem:[#allocation11 + $0x50] sm:$0xf]
    %v2761 = vld [vmem:[#allocation11 + $0x54] sm:$0xf]
    %v2762 = vld [vmem:[#allocation11 + $0x58] sm:$0xf]
    %v2763 = vld [vmem:[#allocation11 + $0x5c] sm:$0xf]
    %v2764 = vld [vmem:[#allocation11 + $0x60] sm:$0xf]
    %v2765 = vld [vmem:[#allocation11 + $0x64] sm:$0xf]
    %v2766 = vld [vmem:[#allocation11 + $0x68] sm:$0xf]
    %v2767 = vld [vmem:[#allocation11 + $0x6c] sm:$0xf]
    %v2768 = vld [vmem:[#allocation11 + $0x70] sm:$0xf]
    %v2769 = vld [vmem:[#allocation11 + $0x74] sm:$0xf]
    %v2770 = vld [vmem:[#allocation11 + $0x78] sm:$0xf]
    %v2771 = vld [vmem:[#allocation11 + $0x7c] sm:$0xf]
    %v2772 = vld [vmem:[#allocation11 + $0x80] sm:$0xf]
    %v2773 = vld [vmem:[#allocation11 + $0x84] sm:$0xf]
    %v2774 = vld [vmem:[#allocation11 + $0x88] sm:$0xf]
    %v2775 = vld [vmem:[#allocation11 + $0x8c] sm:$0xf]
    %v2776 = vld [vmem:[#allocation11 + $0x90] sm:$0xf]
    %v2777 = vld [vmem:[#allocation11 + $0x94] sm:$0xf]
    %v2778 = vld [vmem:[#allocation11 + $0x98] sm:$0xf]
    %v2779 = vld [vmem:[#allocation11 + $0x9c] sm:$0xf]
    %v2780 = vld [vmem:[#allocation11 + $0xa0] sm:$0xf]
    %v2781 = vld [vmem:[#allocation11 + $0xa4] sm:$0xf]
    %v2782 = vld [vmem:[#allocation11 + $0xa8] sm:$0xf]
    %v2783 = vld [vmem:[#allocation11 + $0xac] sm:$0xf]
    %v2784 = vld [vmem:[#allocation11 + $0xb0] sm:$0xf]
    %v2785 = vld [vmem:[#allocation11 + $0xb4] sm:$0xf]
    %v2786 = vld [vmem:[#allocation11 + $0xb8] sm:$0xf]
    %v2787 = vld [vmem:[#allocation11 + $0xbc] sm:$0xf]
    %v2788 = vld [vmem:[#allocation11 + $0xc0] sm:$0xf]
    %v2789 = vld [vmem:[#allocation11 + $0xc4] sm:$0xf]
    %v2790 = vld [vmem:[#allocation11 + $0xc8] sm:$0xf]
    %v2791 = vld [vmem:[#allocation11 + $0xcc] sm:$0xf]
    %v2792 = vld [vmem:[#allocation11 + $0xd0] sm:$0xf]
    %v2793 = vld [vmem:[#allocation11 + $0xd4] sm:$0xf]
    %v2794 = vld [vmem:[#allocation11 + $0xd8] sm:$0xf]
    %v2795 = vld [vmem:[#allocation11 + $0xdc] sm:$0xf]
    %v2796 = vld [vmem:[#allocation11 + $0xe0] sm:$0xf]
    %v2797 = vld [vmem:[#allocation11 + $0xe4] sm:$0xf]
    %v2798 = vld [vmem:[#allocation11 + $0xe8] sm:$0xf]
    %v2799 = vld [vmem:[#allocation11 + $0xec] sm:$0xf]
    %v2800 = vld [vmem:[#allocation11 + $0xf0] sm:$0xf]
    %v2801 = vld [vmem:[#allocation11 + $0xf4] sm:$0xf]
    %v2802 = vld [vmem:[#allocation11 + $0xf8] sm:$0xf]
    %v2803 = vld [vmem:[#allocation11 + $0xfc] sm:$0xf]
    %v2804 = vld [vmem:[#allocation11 + $0x100] sm:$0xf]
    %v2805 = vld [vmem:[#allocation11 + $0x104] sm:$0xf]
    %v2806 = vld [vmem:[#allocation11 + $0x108] sm:$0xf]
    %v2807 = vld [vmem:[#allocation11 + $0x10c] sm:$0xf]
    %v2808 = vld [vmem:[#allocation11 + $0x110] sm:$0xf]
    %v2809 = vld [vmem:[#allocation11 + $0x114] sm:$0xf]
    %v2810 = vld [vmem:[#allocation11 + $0x118] sm:$0xf]
    %v2811 = vld [vmem:[#allocation11 + $0x11c] sm:$0xf]
    %v2812 = vld [vmem:[#allocation11 + $0x120] sm:$0xf]
    %v2813 = vld [vmem:[#allocation11 + $0x124] sm:$0xf]
    %v2814 = vld [vmem:[#allocation11 + $0x128] sm:$0xf]
    %v2815 = vld [vmem:[#allocation11 + $0x12c] sm:$0xf]
    %v2816 = vld [vmem:[#allocation11 + $0x130] sm:$0xf]
    %v2817 = vld [vmem:[#allocation11 + $0x134] sm:$0xf]
    %v2818 = vld [vmem:[#allocation11 + $0x138] sm:$0xf]
    %v2819 = vld [vmem:[#allocation11 + $0x13c] sm:$0xf]
    %v2820 = vld [vmem:[#allocation13] sm:$0x1]
    %v2822 = vlaneseq
    %v2823 = vshrl.u32 %v2822, 7
    %v2824 = vsub.s32 0, %v2823
    %v2825 = vrot.slane %v2820, %v2824
    %v2907 = vunpack.c.l.b16 %v2740
    %v2908 = vunpack.c.l.b16 %v2741
    %v2909 = vunpack.c.l.b16 %v2742
    %v2910 = vunpack.c.l.b16 %v2743
    %v2911 = vunpack.c.l.b16 %v2744
    %v2912 = vunpack.c.l.b16 %v2745
    %v2913 = vunpack.c.l.b16 %v2746
    %v2914 = vunpack.c.l.b16 %v2747
    %v2915 = vunpack.c.l.b16 %v2748
    %v2916 = vunpack.c.l.b16 %v2749
    %v2917 = vunpack.c.l.b16 %v2750
    %v2918 = vunpack.c.l.b16 %v2751
    %v2919 = vunpack.c.l.b16 %v2752
    %v2920 = vunpack.c.l.b16 %v2753
    %v2921 = vunpack.c.l.b16 %v2754
    %v2922 = vunpack.c.l.b16 %v2755
    %v2923 = vunpack.c.l.b16 %v2756
    %v2924 = vunpack.c.l.b16 %v2757
    %v2925 = vunpack.c.l.b16 %v2758
    %v2926 = vunpack.c.l.b16 %v2759
    %v2927 = vunpack.c.l.b16 %v2760
    %v2928 = vunpack.c.l.b16 %v2761
    %v2929 = vunpack.c.l.b16 %v2762
    %v2930 = vunpack.c.l.b16 %v2763
    %v2931 = vunpack.c.l.b16 %v2764
    %v2932 = vunpack.c.l.b16 %v2765
    %v2933 = vunpack.c.l.b16 %v2766
    %v2934 = vunpack.c.l.b16 %v2767
    %v2935 = vunpack.c.l.b16 %v2768
    %v2936 = vunpack.c.l.b16 %v2769
    %v2937 = vunpack.c.l.b16 %v2770
    %v2938 = vunpack.c.l.b16 %v2771
    %v2939 = vunpack.c.l.b16 %v2772
    %v2940 = vunpack.c.l.b16 %v2773
    %v2941 = vunpack.c.l.b16 %v2774
    %v2942 = vunpack.c.l.b16 %v2775
    %v2943 = vunpack.c.l.b16 %v2776
    %v2944 = vunpack.c.l.b16 %v2777
    %v2945 = vunpack.c.l.b16 %v2778
    %v2946 = vunpack.c.l.b16 %v2779
    %v2947 = vunpack.c.l.b16 %v2780
    %v2948 = vunpack.c.l.b16 %v2781
    %v2949 = vunpack.c.l.b16 %v2782
    %v2950 = vunpack.c.l.b16 %v2783
    %v2951 = vunpack.c.l.b16 %v2784
    %v2952 = vunpack.c.l.b16 %v2785
    %v2953 = vunpack.c.l.b16 %v2786
    %v2954 = vunpack.c.l.b16 %v2787
    %v2955 = vunpack.c.l.b16 %v2788
    %v2956 = vunpack.c.l.b16 %v2789
    %v2957 = vunpack.c.l.b16 %v2790
    %v2958 = vunpack.c.l.b16 %v2791
    %v2959 = vunpack.c.l.b16 %v2792
    %v2960 = vunpack.c.l.b16 %v2793
    %v2961 = vunpack.c.l.b16 %v2794
    %v2962 = vunpack.c.l.b16 %v2795
    %v2963 = vunpack.c.l.b16 %v2796
    %v2964 = vunpack.c.l.b16 %v2797
    %v2965 = vunpack.c.l.b16 %v2798
    %v2966 = vunpack.c.l.b16 %v2799
    %v2967 = vunpack.c.l.b16 %v2800
    %v2968 = vunpack.c.l.b16 %v2801
    %v2969 = vunpack.c.l.b16 %v2802
    %v2970 = vunpack.c.l.b16 %v2803
    %v2971 = vunpack.c.l.b16 %v2804
    %v2972 = vunpack.c.l.b16 %v2805
    %v2973 = vunpack.c.l.b16 %v2806
    %v2974 = vunpack.c.l.b16 %v2807
    %v2975 = vunpack.c.l.b16 %v2808
    %v2976 = vunpack.c.l.b16 %v2809
    %v2977 = vunpack.c.l.b16 %v2810
    %v2978 = vunpack.c.l.b16 %v2811
    %v2979 = vunpack.c.l.b16 %v2812
    %v2980 = vunpack.c.l.b16 %v2813
    %v2981 = vunpack.c.l.b16 %v2814
    %v2982 = vunpack.c.l.b16 %v2815
    %v2983 = vunpack.c.l.b16 %v2816
    %v2984 = vunpack.c.l.b16 %v2817
    %v2985 = vunpack.c.l.b16 %v2818
    %v2986 = vunpack.c.l.b16 %v2819
    %v2987 = vpack.c.b16 %v2908, %v2907
    %v2988 = vpack.c.b16 %v2910, %v2909
    %v2989 = vpack.c.b16 %v2912, %v2911
    %v2990 = vpack.c.b16 %v2914, %v2913
    %v2991 = vpack.c.b16 %v2916, %v2915
    %v2992 = vpack.c.b16 %v2918, %v2917
    %v2993 = vpack.c.b16 %v2920, %v2919
    %v2994 = vpack.c.b16 %v2922, %v2921
    %v2995 = vpack.c.b16 %v2924, %v2923
    %v2996 = vpack.c.b16 %v2926, %v2925
    %v2997 = vpack.c.b16 %v2928, %v2927
    %v2998 = vpack.c.b16 %v2930, %v2929
    %v2999 = vpack.c.b16 %v2932, %v2931
    %v3000 = vpack.c.b16 %v2934, %v2933
    %v3001 = vpack.c.b16 %v2936, %v2935
    %v3002 = vpack.c.b16 %v2938, %v2937
    %v3003 = vpack.c.b16 %v2940, %v2939
    %v3004 = vpack.c.b16 %v2942, %v2941
    %v3005 = vpack.c.b16 %v2944, %v2943
    %v3006 = vpack.c.b16 %v2946, %v2945
    %v3007 = vpack.c.b16 %v2948, %v2947
    %v3008 = vpack.c.b16 %v2950, %v2949
    %v3009 = vpack.c.b16 %v2952, %v2951
    %v3010 = vpack.c.b16 %v2954, %v2953
    %v3011 = vpack.c.b16 %v2956, %v2955
    %v3012 = vpack.c.b16 %v2958, %v2957
    %v3013 = vpack.c.b16 %v2960, %v2959
    %v3014 = vpack.c.b16 %v2962, %v2961
    %v3015 = vpack.c.b16 %v2964, %v2963
    %v3016 = vpack.c.b16 %v2966, %v2965
    %v3017 = vpack.c.b16 %v2968, %v2967
    %v3018 = vpack.c.b16 %v2970, %v2969
    %v3019 = vpack.c.b16 %v2972, %v2971
    %v3020 = vpack.c.b16 %v2974, %v2973
    %v3021 = vpack.c.b16 %v2976, %v2975
    %v3022 = vpack.c.b16 %v2978, %v2977
    %v3023 = vpack.c.b16 %v2980, %v2979
    %v3024 = vpack.c.b16 %v2982, %v2981
    %v3025 = vpack.c.b16 %v2984, %v2983
    %v3026 = vpack.c.b16 %v2986, %v2985
    %3067 = vmatprep.subr.bf16.mxu0 0
    %3068 = vmatpush1.bf16.msra.mxu0 %v2994
    %3069 = vmatprep.subr.bf16.mxu0 0
    %3070 = vmatpush1.bf16.msra.mxu0 %v2993
    %3071 = vmatprep.subr.bf16.mxu0 0
    %3072 = vmatpush1.bf16.msra.mxu0 %v2992
    %3073 = vmatprep.subr.bf16.mxu0 0
    %3074 = vmatpush1.bf16.msra.mxu0 %v2991
    %3075 = vmatprep.subr.bf16.mxu0 0
    %3076 = vmatpush1.bf16.msra.mxu0 %v2990
    %3077 = vmatprep.subr.bf16.mxu0 0
    %3078 = vmatpush1.bf16.msra.mxu0 %v2989
    %3079 = vmatprep.subr.bf16.mxu0 0
    %3080 = vmatpush1.bf16.msra.mxu0 %v2988
    %3081 = vmatprep.subr.bf16.mxu0 0
    %3082 = vmatpush1.bf16.msra.mxu0 %v2987
    %3083 = vmatprep.subr.bf16.mxu0 0
    %3084 = vmatpush2.bf16.msra.mxu0 %v3002
    %3085 = vmatprep.subr.bf16.mxu0 0
    %3086 = vmatpush2.bf16.msra.mxu0 %v3001
    %3087 = vmatprep.subr.bf16.mxu0 0
    %3088 = vmatpush2.bf16.msra.mxu0 %v3000
    %3089 = vmatprep.subr.bf16.mxu0 0
    %3090 = vmatpush2.bf16.msra.mxu0 %v2999
    %3091 = vmatprep.subr.bf16.mxu0 0
    %3092 = vmatpush2.bf16.msra.mxu0 %v2998
    %3093 = vmatprep.subr.bf16.mxu0 0
    %3094 = vmatpush2.bf16.msra.mxu0 %v2997
    %3095 = vmatprep.subr.bf16.mxu0 0
    %3096 = vmatpush2.bf16.msra.mxu0 %v2996
    %3097 = vmatprep.subr.bf16.mxu0 0
    %3098 = vmatpush2.bf16.msra.mxu0 %v2995
    %3099 = vmatprep.mubr.bf16.mxu0 %v2736
    %3100 = vmatmul.mubr.bf16.gmra.mxu0 %v2735
    %v3101 = vpop.f32.mrf.mxu0
    %v3102 = vadd.f32 %v2825, %v3101
    %v3103 = vpop.f32.mrf.mxu0
    %v3104 = vpop.f32.mrf.mxu0
    %v3105 = vpop.f32.mrf.mxu0
    %3106 = vdwg.mxu0
    %3107 = vmatprep.subr.bf16.mxu0 0
    %3108 = vmatpush1.bf16.msra.mxu0 %v3010
    %3109 = vmatprep.subr.bf16.mxu0 0
    %3110 = vmatpush1.bf16.msra.mxu0 %v3009
    %3111 = vmatprep.subr.bf16.mxu0 0
    %3112 = vmatpush1.bf16.msra.mxu0 %v3008
    %3113 = vmatprep.subr.bf16.mxu0 0
    %3114 = vmatpush1.bf16.msra.mxu0 %v3007
    %3115 = vmatprep.subr.bf16.mxu0 0
    %3116 = vmatpush1.bf16.msra.mxu0 %v3006
    %3117 = vmatprep.subr.bf16.mxu0 0
    %3118 = vmatpush1.bf16.msra.mxu0 %v3005
    %3119 = vmatprep.subr.bf16.mxu0 0
    %3120 = vmatpush1.bf16.msra.mxu0 %v3004
    %3121 = vmatprep.subr.bf16.mxu0 0
    %3122 = vmatpush1.bf16.msra.mxu0 %v3003
    %3123 = vmatprep.subr.bf16.mxu0 0
    %3124 = vmatpush2.bf16.msra.mxu0 %v3018
    %3125 = vmatprep.subr.bf16.mxu0 0
    %3126 = vmatpush2.bf16.msra.mxu0 %v3017
    %3127 = vmatprep.subr.bf16.mxu0 0
    %3128 = vmatpush2.bf16.msra.mxu0 %v3016
    %3129 = vmatprep.subr.bf16.mxu0 0
    %3130 = vmatpush2.bf16.msra.mxu0 %v3015
    %3131 = vmatprep.subr.bf16.mxu0 0
    %3132 = vmatpush2.bf16.msra.mxu0 %v3014
    %3133 = vmatprep.subr.bf16.mxu0 0
    %3134 = vmatpush2.bf16.msra.mxu0 %v3013
    %3135 = vmatprep.subr.bf16.mxu0 0
    %3136 = vmatpush2.bf16.msra.mxu0 %v3012
    %3137 = vmatprep.subr.bf16.mxu0 0
    %3138 = vmatpush2.bf16.msra.mxu0 %v3011
    %3139 = vmatprep.mubr.bf16.mxu0 %v2738
    %3140 = vmatmul.mubr.bf16.gmra.mxu0 %v2737
    %v3141 = vpop.f32.mrf.mxu0
    %v3142 = vadd.f32 %v3102, %v3141
    %v3143 = vpop.f32.mrf.mxu0
    %v3144 = vpop.f32.mrf.mxu0
    %v3145 = vpop.f32.mrf.mxu0
    %3146 = vdwg.mxu0
    %3147 = vmatprep.subr.bf16.mxu0 0
    %3148 = vmatpush1.bf16.msra.mxu0 %v3026
    %3149 = vmatprep.subr.bf16.mxu0 0
    %3150 = vmatpush1.bf16.msra.mxu0 %v3025
    %3151 = vmatprep.subr.bf16.mxu0 0
    %3152 = vmatpush1.bf16.msra.mxu0 %v3024
    %3153 = vmatprep.subr.bf16.mxu0 0
    %3154 = vmatpush1.bf16.msra.mxu0 %v3023
    %3155 = vmatprep.subr.bf16.mxu0 0
    %3156 = vmatpush1.bf16.msra.mxu0 %v3022
    %3157 = vmatprep.subr.bf16.mxu0 0
    %3158 = vmatpush1.bf16.msra.mxu0 %v3021
    %3159 = vmatprep.subr.bf16.mxu0 0
    %3160 = vmatpush1.bf16.msra.mxu0 %v3020
    %3161 = vmatprep.subr.bf16.mxu0 0
    %3162 = vmatpush1.bf16.msra.mxu0 %v3019
    %3163 = vmatprep.subr.bf16.mxu0 0
    %3164 = vmatpush2.bf16.msra.mxu0 0
    %3165 = vmatprep.subr.bf16.mxu0 0
    %3166 = vmatpush2.bf16.msra.mxu0 0
    %3167 = vmatprep.subr.bf16.mxu0 0
    %3168 = vmatpush2.bf16.msra.mxu0 0
    %3169 = vmatprep.subr.bf16.mxu0 0
    %3170 = vmatpush2.bf16.msra.mxu0 0
    %3171 = vmatprep.subr.bf16.mxu0 0
    %3172 = vmatpush2.bf16.msra.mxu0 0
    %3173 = vmatprep.subr.bf16.mxu0 0
    %3174 = vmatpush2.bf16.msra.mxu0 0
    %3175 = vmatprep.subr.bf16.mxu0 0
    %3176 = vmatpush2.bf16.msra.mxu0 0
    %3177 = vmatprep.subr.bf16.mxu0 0
    %3178 = vmatpush2.bf16.msra.mxu0 0
    %3179 = vmatprep.mubr.bf16.mxu0 0
    %3180 = vmatmul.mubr.bf16.gmra.mxu0 %v2739
    %v3181 = vpop.f32.mrf.mxu0
    %v3182 = vadd.f32 %v3142, %v3181
    %v3183 = vpop.f32.mrf.mxu0
    %v3184 = vpop.f32.mrf.mxu0
    %v3185 = vpop.f32.mrf.mxu0
    %3186 = vdwg.mxu0
    %v3187 = vtanh.pop %v3182
    %3188 = vst [vmem:[#allocation14] sm:$0xff] %v3187
    // Predicated region
    $region58: #{tpu_custom_call.1} parent=1 // pred_check
      _
    $region59: #{tpu_custom_call.1} parent=1 // pred_check_branch
      %3190 = sbr.rel (0) target = $region61
    $region60: #{tpu_custom_call.1} parent=1 // pred_region
      %s3192 = ssub.s32 128, 128
      %3193 = vsyncadd [#allocation4], %s3192
      %s3195 = sshll.u32 [#allocation14], 4
      %s3196 = int_to_ptr.vmem [resolvable:$true] %s3195
      %3198 = dma.vmem_to_hbm [thread:$0]  %s3196, 128, %s7, [#allocation4]
    $region61: #{tpu_custom_call.1} parent=1 // pred_fallthru
      _
    // Predicated region
    $region62: #{tpu_custom_call.1} parent=1 // pred_check
      _
    $region63: #{tpu_custom_call.1} parent=1 // pred_check_branch
      %3200 = sbr.rel (0) target = $region65
    $region64: #{tpu_custom_call.1} parent=1 // pred_region
      %3201 = dma.done [#allocation4], 128
    $region65: #{tpu_custom_call.1} parent=1 // pred_fallthru
      _
    %3202 = vsyncpa [#allocation3], 1
    %3203 = vsyncpa [#allocation6], 1
    %3204 = vsyncpa [#allocation9], 1
    %3205 = vsyncpa [#allocation12], 1
    %3206 = vsyncpa [#allocation4], 1

</llo_original>
